<compile_context>
chip_gen: v6e
topology: v6e:2x2x1
jax: 0.10.0
libtpu: 0.0.40
codegen_flags: <defaults>
</compile_context>

<pallas_src>
import functools

import jax
import jax.numpy as jnp
import numpy as np
from jax.experimental import pallas as pl
from jax.experimental.pallas import tpu as pltpu


def _maxwell_kernel(pred_ref, sig_ref, eps_ref, src_ref, lz_ref, rz_ref, prev_ref, *,
                    nz, H, W, t_blk, use_carry, c_sig, c_eps, inv_dx, inv_dy, inv_dz):
    """One (batch b, time-block tb) slab of t_blk time steps.

    pred_ref : (1, t_blk, 3, nz, HW)  prediction[b, tb*t_blk:(tb+1)*t_blk]
    sig_ref  : (1, 1, nz, HW)         sigez  (coefficients channel-block 5)
    eps_ref  : (1, 1, nz, HW)         epsrz  (coefficients channel-block 2)
    src_ref  : (1, t_blk, nz, HW)     source[b, tb*t_blk:(tb+1)*t_blk]
    lz_ref   : (1, t_blk, nz, HW)     output, time-padded (slot u=0 is dropped)
    rz_ref   : (1, t_blk, nz, HW)     output, time-padded (slot u=0 is dropped)
    prev_ref : VMEM (nz, HW)          Ez carry across time-block boundaries
    """
    HW = H * W
    f32 = jnp.float32
    tb = pl.program_id(1)

    if use_carry:
        @pl.when(tb == 0)
        def _():
            # Start of a batch's time sweep: seed the carry with Ez[t=0].  The
            # u=0 output slot computed from it is discarded by the wrapper.
            prev_ref[...] = pred_ref[0, 0, 0]

    # Loop-invariant factors: pre-scaled coefficients and the single border mask
    # shared by lz and rz (keep rows 1..H-3 and cols 0..W-2 of the (H, W) grid).
    sig_s = sig_ref[0, 0].astype(f32) * c_sig
    eps_s = eps_ref[0, 0].astype(f32) * c_eps
    flat = jax.lax.broadcasted_iota(jnp.int32, (nz, HW), 1)
    keep = (flat >= W) & (flat < (H - 2) * W) & ((flat % W) <= W - 2)

    def step(s, carry):
        # Current fields at absolute time u = tb*t_blk + s (output index u-1).
        ez_c = pred_ref[0, s, 0].astype(f32)          # Ez[u]   (nz, HW)
        hx = pred_ref[0, s, 1].astype(f32)            # Hx[u]
        hy = pred_ref[0, s, 2].astype(f32)            # Hy[u]
        src = src_ref[0, s].astype(f32)               # source[u]

        # Previous-time Ez: in-block for s > 0, scratch carry at block start.
        ez_p = pred_ref[0, jnp.maximum(s - 1, 0), 0].astype(f32)
        if use_carry:
            ez_p = jnp.where(s == 0, prev_ref[...].astype(f32), ez_p)

        # lz = sigma*Ez + eps*dEz/dt, every scalar factor folded at trace time.
        lz = sig_s * ez_c + eps_s * (ez_c - ez_p)
        lz_ref[0, s] = jnp.where(keep, lz, 0.0).astype(lz_ref.dtype)

        # rz = curl(H) - source via XLU rolls on the flattened (H*W) lane dim:
        #   shift +W -> neighbour (h+1, w),  shift +1 -> neighbour (h, w+1).
        hy_up = pltpu.roll(hy, HW - W, 1)             # == jnp.roll(hy, -W, axis=1)
        hx_rt = pltpu.roll(hx, HW - 1, 1)             # == jnp.roll(hx, -1, axis=1)
        rz = (hy_up - hy) * inv_dx - (hx_rt - hx) * inv_dy - src * inv_dz
        rz_ref[0, s] = jnp.where(keep, rz, 0.0).astype(rz_ref.dtype)
        return carry

    jax.lax.fori_loop(0, t_blk, step, 0, unroll=True)

    if use_carry:
        # Ez at this block's last time becomes the carry for the next block
        # (one scratch store per block, not per step).
        prev_ref[...] = pred_ref[0, t_blk - 1, 0]


def maxwell_ez_hx_hy(prediction, coefficients, source, *, dx, dy, dz, dte,
                     delta_t, murz=1.0, nz=2, max_time_block=8):
    B, T, C, H, W = prediction.shape
    assert C == 3 * nz, "prediction must stack [Ez | Hx | Hy] along channels"
    assert coefficients.shape == (B, 6 * nz, H, W)
    assert source.shape == (B, T, nz, H, W)
    HW = H * W
    Tm1 = T - 1

    # Fold every scalar factor at trace time (Python float64 arithmetic).
    c_sig = 100.0 * 1e-9
    c_eps = 100.0 * 1e-9 / (dte * delta_t)
    inv_dx = 1e-9 / dx
    inv_dy = 1e-9 / dy
    inv_dz = 1e-9 / dz

    # Free, contiguous reshapes only (no HBM copies): fold (H, W) -> H*W so the
    # lane dim is as dense as possible; split channels so field extraction is a
    # leading-dim index in-kernel.
    pred_f = prediction.reshape(B, T, 3, nz, HW)
    coef_f = coefficients.reshape(B, 6, nz, HW)
    src_f = source.reshape(B, T, nz, HW)

    # Time blocking: largest divisor of T that fits a conservative VMEM budget
    # (the (nz, HW) minor tiles are sublane-padded to 8; x2 for double buffering).
    nz_pad = -(-nz // 8) * 8
    step_bytes = 6 * nz_pad * HW * prediction.dtype.itemsize * 2
    cap = int(max(1, min(max_time_block, (8 << 20) // max(step_bytes, 1))))
    t_blk = 1
    for d in range(1, min(cap, T) + 1):
        if T % d == 0:
            t_blk = d
    nt = T // t_blk
    use_carry = nt > 1  # prev-Ez only crosses a block boundary when there is one

    kernel = functools.partial(
        _maxwell_kernel, nz=nz, H=H, W=W, t_blk=t_blk, use_carry=use_carry,
        c_sig=c_sig, c_eps=c_eps, inv_dx=inv_dx, inv_dy=inv_dy, inv_dz=inv_dz)

    # All channel / time offsets live in the index_maps; raw (reshaped) arrays
    # are passed straight through.
    pred_spec = pl.BlockSpec((1, t_blk, 3, nz, HW), lambda b, tb: (b, tb, 0, 0, 0))
    sig_spec = pl.BlockSpec((1, 1, nz, HW), lambda b, tb: (b, 5, 0, 0))
    eps_spec = pl.BlockSpec((1, 1, nz, HW), lambda b, tb: (b, 2, 0, 0))
    src_spec = pl.BlockSpec((1, t_blk, nz, HW), lambda b, tb: (b, tb, 0, 0))
    out_spec = pl.BlockSpec((1, t_blk, nz, HW), lambda b, tb: (b, tb, 0, 0))

    out_sds = jax.ShapeDtypeStruct((B, T, nz, HW), prediction.dtype)
    lz_pad, rz_pad = pl.pallas_call(
        kernel,
        grid=(B, nt),
        in_specs=[pred_spec, sig_spec, eps_spec, src_spec],
        out_specs=(out_spec, out_spec),
        out_shape=(out_sds, out_sds),
        scratch_shapes=[pltpu.VMEM((nz, HW), prediction.dtype)],
        compiler_params=pltpu.CompilerParams(
            # B may split across TensorCores; the time axis stays sequential
            # for the Ez carry held in VMEM scratch.
            dimension_semantics=("parallel", "arbitrary")),
    )(pred_f, coef_f, coef_f, src_f)

    # Time slot u=0 is a throw-away (outputs exist for t=1..T-1); the spatial
    # border is already zeroed in-kernel, so this is pure slicing/reshape and
    # fuses with the consumer under jit.
    lz = lz_pad[:, 1:].reshape(B, Tm1, nz, H, W)[..., : H - 1, : W - 1]
    rz = rz_pad[:, 1:].reshape(B, Tm1, nz, H, W)[..., : H - 1, : W - 1]
    return lz, rz


def _reference(prediction, coefficients, source, *, dx, dy, dz, dte, delta_t, nz):
    # Pure-JAX transcription of the PyTorch forward (verification only).
    Ez = prediction[:, :, 0:nz]
    Hx = prediction[:, :, nz:2 * nz]
    Hy = prediction[:, :, 2 * nz:3 * nz]
    sigez = coefficients[:, 5 * nz:6 * nz]
    epsrz = coefficients[:, 2 * nz:3 * nz]
    dhydx = (Hy[:, 1:, :, 1:, :] - Hy[:, 1:, :, :-1, :]) / dx
    dhxdy = (Hx[:, 1:, :, :, 1:] - Hx[:, 1:, :, :, :-1]) / dy
    curnt_Ez = Ez[:, 1:] * 100
    prev_Ez = Ez[:, :-1] * 100
    lz = (sigez[:, None] * curnt_Ez
          + epsrz[:, None] * (curnt_Ez - prev_Ez) / dte / delta_t)[..., :-1, :-1]
    rz = dhydx[..., :-1] - dhxdy[..., :-1, :] - source[:, 1:, :, :-1, :-1] / dz
    lz = lz.at[..., 0:1, :].set(0).at[..., -1:, :].set(0)
    rz = rz.at[..., 0:1, :].set(0).at[..., -1:, :].set(0)
    return lz / 1e9, rz / 1e9


if __name__ == "__main__":
    # Deterministic "module parameters" (scalars from __init__).
    dx, dy, dz = 1e-3, 1e-3, 1e-3
    dte, delta_t = 1e-12, 1.0
    nz = 2

    # Small shapes consistent with the forward: B=2, T=8, C=3*nz=6, H=W=16.
    B, T, H, W = 2, 8, 16, 16
    key = jax.random.PRNGKey(0)
    k1, k2, k3 = jax.random.split(key, 3)
    prediction = jax.random.normal(k1, (B, T, 3 * nz, H, W), dtype=jnp.float32)
    coefficients = jax.random.normal(k2, (B, 6 * nz, H, W), dtype=jnp.float32)
    source = jax.random.normal(k3, (B, T, nz, H, W), dtype=jnp.float32)

    lz, rz = maxwell_ez_hx_hy(prediction, coefficients, source,
                              dx=dx, dy=dy, dz=dz, dte=dte, delta_t=delta_t, nz=nz)
    jax.block_until_ready((lz, rz))

    lz_ref, rz_ref = _reference(prediction, coefficients, source,
                                dx=dx, dy=dy, dz=dz, dte=dte, delta_t=delta_t, nz=nz)

    def _assert_close(actual, desired, name):
        actual = np.asarray(actual)
        desired = np.asarray(desired)
        scale = float(np.max(np.abs(desired)))
        # The eps*(Ez_t - Ez_{t-1})/dte term amplifies f32 rounding by ~1e12, so a
        # pure elementwise rtol is too strict once the scalar constants are folded;
        # bound the error against the output's dynamic range instead.  Real bugs
        # produce errors of the order of the values themselves and are caught.
        np.testing.assert_allclose(actual, desired, rtol=1e-3,
                                   atol=1e-4 * scale + 1e-30, err_msg=name)

    _assert_close(lz, lz_ref, "lz")
    _assert_close(rz, rz_ref, "rz")

    print("KERNEL_OK")
</pallas_src>

<mosaic_0001>
module attributes {stable_mosaic.version = 11 : i64} {
  func.func @_maxwell_kernel(%arg0: i32, %arg1: i32, %arg2: memref<1x8x3x2x256xf32, #tpu.memory_space<vmem>>, %arg3: memref<1x1x2x256xf32, #tpu.memory_space<vmem>>, %arg4: memref<1x1x2x256xf32, #tpu.memory_space<vmem>>, %arg5: memref<1x8x2x256xf32, #tpu.memory_space<vmem>>, %arg6: memref<1x8x2x256xf32, #tpu.memory_space<vmem>>, %arg7: memref<1x8x2x256xf32, #tpu.memory_space<vmem>>, %arg8: memref<2x256xf32, #tpu.memory_space<vmem>>) attributes {dimension_semantics = [#tpu.dimension_semantics<parallel>, #tpu.dimension_semantics<arbitrary>], iteration_bounds = array<i64: 2, 1>, scalar_prefetch = 0 : i64, scratch_operands = 1 : i64, tpu.core_type = #tpu.core_type<tc>, window_params = [{transform_indices = @transform_0, window_bounds = array<i64: 1, 8, 3, 2, 256>}, {transform_indices = @transform_1, window_bounds = array<i64: 1, 1, 2, 256>}, {transform_indices = @transform_2, window_bounds = array<i64: 1, 1, 2, 256>}, {transform_indices = @transform_3, window_bounds = array<i64: 1, 8, 2, 256>}, {transform_indices = @transform_4, window_bounds = array<i64: 1, 8, 2, 256>}, {transform_indices = @transform_5, window_bounds = array<i64: 1, 8, 2, 256>}]} {
    %c0 = arith.constant 0 : index
    %c0_0 = arith.constant 0 : index
    %c0_1 = arith.constant 0 : index
    %c0_2 = arith.constant 0 : index
    %0 = vector.load %arg3[%c0, %c0_0, %c0_1, %c0_2] : memref<1x1x2x256xf32, #tpu.memory_space<vmem>>, vector<1x1x2x256xf32>
    %1 = vector.shape_cast %0 : vector<1x1x2x256xf32> to vector<2x256xf32>
    %cst = arith.constant 1.000000e-07 : f32
    %2 = vector.broadcast %cst : f32 to vector<2x256xf32>
    %3 = arith.mulf %1, %2 : vector<2x256xf32>
    %c0_3 = arith.constant 0 : index
    %c0_4 = arith.constant 0 : index
    %c0_5 = arith.constant 0 : index
    %c0_6 = arith.constant 0 : index
    %4 = vector.load %arg4[%c0_3, %c0_4, %c0_5, %c0_6] : memref<1x1x2x256xf32, #tpu.memory_space<vmem>>, vector<1x1x2x256xf32>
    %5 = vector.shape_cast %4 : vector<1x1x2x256xf32> to vector<2x256xf32>
    %cst_7 = arith.constant 1.000000e+05 : f32
    %6 = vector.broadcast %cst_7 : f32 to vector<2x256xf32>
    %7 = arith.mulf %5, %6 : vector<2x256xf32>
    %8 = tpu.iota {dimensions = array<i32: 1>} : vector<2x256xi32>
    %c16_i32 = arith.constant 16 : i32
    %9 = vector.broadcast %c16_i32 : i32 to vector<2x256xi32>
    %10 = arith.cmpi sge, %8, %9 : vector<2x256xi32>
    %c224_i32 = arith.constant 224 : i32
    %11 = vector.broadcast %c224_i32 : i32 to vector<2x256xi32>
    %12 = arith.cmpi slt, %8, %11 : vector<2x256xi32>
    %13 = arith.andi %10, %12 : vector<2x256xi1>
    %c16_i32_8 = arith.constant 16 : i32
    %c0_i32 = arith.constant 0 : i32
    %14 = arith.cmpi eq, %c16_i32_8, %c0_i32 : i32
    %c1_i32 = arith.constant 1 : i32
    %15 = arith.select %14, %c1_i32, %c16_i32_8 : i32
    %16 = vector.broadcast %15 : i32 to vector<2x256xi32>
    %17 = arith.remsi %8, %16 : vector<2x256xi32>
    %c0_i32_9 = arith.constant 0 : i32
    %18 = vector.broadcast %c0_i32_9 : i32 to vector<2x256xi32>
    %19 = arith.cmpi ne, %17, %18 : vector<2x256xi32>
    %c0_i32_10 = arith.constant 0 : i32
    %20 = vector.broadcast %c0_i32_10 : i32 to vector<2x256xi32>
    %21 = arith.cmpi slt, %17, %20 : vector<2x256xi32>
    %c0_i32_11 = arith.constant 0 : i32
    %22 = arith.cmpi slt, %15, %c0_i32_11 : i32
    %23 = vector.broadcast %22 : i1 to vector<2x256xi1>
    %24 = vector.broadcast %23 : vector<2x256xi1> to vector<2x256xi1>
    %25 = arith.xori %21, %24 : vector<2x256xi1>
    %26 = arith.andi %25, %19 : vector<2x256xi1>
    %27 = vector.broadcast %15 : i32 to vector<2x256xi32>
    %28 = arith.addi %17, %27 : vector<2x256xi32>
    %29 = arith.select %26, %28, %17 : vector<2x256xi1>, vector<2x256xi32>
    %c14_i32 = arith.constant 14 : i32
    %30 = vector.broadcast %c14_i32 : i32 to vector<2x256xi32>
    %31 = arith.cmpi sle, %29, %30 : vector<2x256xi32>
    %32 = arith.andi %13, %31 : vector<2x256xi1>
    %c0_i32_12 = arith.constant 0 : i32
    %c0_13 = arith.constant 0 : index
    %33 = arith.index_cast %c0_i32_12 : i32 to index
    %c0_14 = arith.constant 0 : index
    %c0_15 = arith.constant 0 : index
    %c0_16 = arith.constant 0 : index
    %34 = vector.load %arg2[%c0_13, %33, %c0_14, %c0_15, %c0_16] : memref<1x8x3x2x256xf32, #tpu.memory_space<vmem>>, vector<1x1x1x2x256xf32>
    %35 = vector.shape_cast %34 : vector<1x1x1x2x256xf32> to vector<2x256xf32>
    %c0_17 = arith.constant 0 : index
    %36 = arith.index_cast %c0_i32_12 : i32 to index
    %c1 = arith.constant 1 : index
    %c0_18 = arith.constant 0 : index
    %c0_19 = arith.constant 0 : index
    %37 = vector.load %arg2[%c0_17, %36, %c1, %c0_18, %c0_19] : memref<1x8x3x2x256xf32, #tpu.memory_space<vmem>>, vector<1x1x1x2x256xf32>
    %38 = vector.shape_cast %37 : vector<1x1x1x2x256xf32> to vector<2x256xf32>
    %c0_20 = arith.constant 0 : index
    %39 = arith.index_cast %c0_i32_12 : i32 to index
    %c2 = arith.constant 2 : index
    %c0_21 = arith.constant 0 : index
    %c0_22 = arith.constant 0 : index
    %40 = vector.load %arg2[%c0_20, %39, %c2, %c0_21, %c0_22] : memref<1x8x3x2x256xf32, #tpu.memory_space<vmem>>, vector<1x1x1x2x256xf32>
    %41 = vector.shape_cast %40 : vector<1x1x1x2x256xf32> to vector<2x256xf32>
    %c0_23 = arith.constant 0 : index
    %42 = arith.index_cast %c0_i32_12 : i32 to index
    %c0_24 = arith.constant 0 : index
    %c0_25 = arith.constant 0 : index
    %43 = vector.load %arg5[%c0_23, %42, %c0_24, %c0_25] : memref<1x8x2x256xf32, #tpu.memory_space<vmem>>, vector<1x1x2x256xf32>
    %44 = vector.shape_cast %43 : vector<1x1x2x256xf32> to vector<2x256xf32>
    %c1_i32_26 = arith.constant 1 : i32
    %45 = arith.subi %c0_i32_12, %c1_i32_26 : i32
    %c0_i32_27 = arith.constant 0 : i32
    %46 = arith.maxsi %45, %c0_i32_27 : i32
    %c0_28 = arith.constant 0 : index
    %47 = arith.index_cast %46 : i32 to index
    %c0_29 = arith.constant 0 : index
    %c0_30 = arith.constant 0 : index
    %c0_31 = arith.constant 0 : index
    %48 = vector.load %arg2[%c0_28, %47, %c0_29, %c0_30, %c0_31] : memref<1x8x3x2x256xf32, #tpu.memory_space<vmem>>, vector<1x1x1x2x256xf32>
    %49 = vector.shape_cast %48 : vector<1x1x1x2x256xf32> to vector<2x256xf32>
    %50 = arith.mulf %3, %35 : vector<2x256xf32>
    %51 = arith.subf %35, %49 : vector<2x256xf32>
    %52 = arith.mulf %7, %51 : vector<2x256xf32>
    %53 = arith.addf %50, %52 : vector<2x256xf32>
    %cst_32 = arith.constant 0.000000e+00 : f32
    %54 = vector.broadcast %cst_32 : f32 to vector<2x256xf32>
    %55 = arith.select %32, %53, %54 : vector<2x256xi1>, vector<2x256xf32>
    %c0_33 = arith.constant 0 : index
    %56 = arith.index_cast %c0_i32_12 : i32 to index
    %c0_34 = arith.constant 0 : index
    %c0_35 = arith.constant 0 : index
    %57 = vector.load %arg6[%c0_33, %56, %c0_34, %c0_35] : memref<1x8x2x256xf32, #tpu.memory_space<vmem>>, vector<1x1x2x256xf32>
    %58 = vector.shape_cast %57 : vector<1x1x2x256xf32> to vector<2x256xf32>
    %59 = vector.shape_cast %55 : vector<2x256xf32> to vector<1x1x2x256xf32>
    tpu.vector_store %arg6[%c0_33, %56, %c0_34, %c0_35], %59 {strides = array<i32>} : memref<1x8x2x256xf32, #tpu.memory_space<vmem>>, vector<1x1x2x256xf32>,
    %c240_i32 = arith.constant 240 : i32
    %60 = tpu.dynamic_rotate %41 by %c240_i32 dim 1 : vector<2x256xf32>, i32 -> vector<2x256xf32>
    %c255_i32 = arith.constant 255 : i32
    %61 = tpu.dynamic_rotate %38 by %c255_i32 dim 1 : vector<2x256xf32>, i32 -> vector<2x256xf32>
    %62 = arith.subf %60, %41 : vector<2x256xf32>
    %cst_36 = arith.constant 9.99999997E-7 : f32
    %63 = vector.broadcast %cst_36 : f32 to vector<2x256xf32>
    %64 = arith.mulf %62, %63 : vector<2x256xf32>
    %65 = arith.subf %61, %38 : vector<2x256xf32>
    %cst_37 = arith.constant 9.99999997E-7 : f32
    %66 = vector.broadcast %cst_37 : f32 to vector<2x256xf32>
    %67 = arith.mulf %65, %66 : vector<2x256xf32>
    %68 = arith.subf %64, %67 : vector<2x256xf32>
    %cst_38 = arith.constant 9.99999997E-7 : f32
    %69 = vector.broadcast %cst_38 : f32 to vector<2x256xf32>
    %70 = arith.mulf %44, %69 : vector<2x256xf32>
    %71 = arith.subf %68, %70 : vector<2x256xf32>
    %cst_39 = arith.constant 0.000000e+00 : f32
    %72 = vector.broadcast %cst_39 : f32 to vector<2x256xf32>
    %73 = arith.select %32, %71, %72 : vector<2x256xi1>, vector<2x256xf32>
    %c0_40 = arith.constant 0 : index
    %74 = arith.index_cast %c0_i32_12 : i32 to index
    %c0_41 = arith.constant 0 : index
    %c0_42 = arith.constant 0 : index
    %75 = vector.load %arg7[%c0_40, %74, %c0_41, %c0_42] : memref<1x8x2x256xf32, #tpu.memory_space<vmem>>, vector<1x1x2x256xf32>
    %76 = vector.shape_cast %75 : vector<1x1x2x256xf32> to vector<2x256xf32>
    %77 = vector.shape_cast %73 : vector<2x256xf32> to vector<1x1x2x256xf32>
    tpu.vector_store %arg7[%c0_40, %74, %c0_41, %c0_42], %77 {strides = array<i32>} : memref<1x8x2x256xf32, #tpu.memory_space<vmem>>, vector<1x1x2x256xf32>,
    %c1_i32_43 = arith.constant 1 : i32
    %c0_44 = arith.constant 0 : index
    %78 = arith.index_cast %c1_i32_43 : i32 to index
    %c0_45 = arith.constant 0 : index
    %c0_46 = arith.constant 0 : index
    %c0_47 = arith.constant 0 : index
    %79 = vector.load %arg2[%c0_44, %78, %c0_45, %c0_46, %c0_47] : memref<1x8x3x2x256xf32, #tpu.memory_space<vmem>>, vector<1x1x1x2x256xf32>
    %80 = vector.shape_cast %79 : vector<1x1x1x2x256xf32> to vector<2x256xf32>
    %c0_48 = arith.constant 0 : index
    %81 = arith.index_cast %c1_i32_43 : i32 to index
    %c1_49 = arith.constant 1 : index
    %c0_50 = arith.constant 0 : index
    %c0_51 = arith.constant 0 : index
    %82 = vector.load %arg2[%c0_48, %81, %c1_49, %c0_50, %c0_51] : memref<1x8x3x2x256xf32, #tpu.memory_space<vmem>>, vector<1x1x1x2x256xf32>
    %83 = vector.shape_cast %82 : vector<1x1x1x2x256xf32> to vector<2x256xf32>
    %c0_52 = arith.constant 0 : index
    %84 = arith.index_cast %c1_i32_43 : i32 to index
    %c2_53 = arith.constant 2 : index
    %c0_54 = arith.constant 0 : index
    %c0_55 = arith.constant 0 : index
    %85 = vector.load %arg2[%c0_52, %84, %c2_53, %c0_54, %c0_55] : memref<1x8x3x2x256xf32, #tpu.memory_space<vmem>>, vector<1x1x1x2x256xf32>
    %86 = vector.shape_cast %85 : vector<1x1x1x2x256xf32> to vector<2x256xf32>
    %c0_56 = arith.constant 0 : index
    %87 = arith.index_cast %c1_i32_43 : i32 to index
    %c0_57 = arith.constant 0 : index
    %c0_58 = arith.constant 0 : index
    %88 = vector.load %arg5[%c0_56, %87, %c0_57, %c0_58] : memref<1x8x2x256xf32, #tpu.memory_space<vmem>>, vector<1x1x2x256xf32>
    %89 = vector.shape_cast %88 : vector<1x1x2x256xf32> to vector<2x256xf32>
    %c1_i32_59 = arith.constant 1 : i32
    %90 = arith.subi %c1_i32_43, %c1_i32_59 : i32
    %c0_i32_60 = arith.constant 0 : i32
    %91 = arith.maxsi %90, %c0_i32_60 : i32
    %c0_61 = arith.constant 0 : index
    %92 = arith.index_cast %91 : i32 to index
    %c0_62 = arith.constant 0 : index
    %c0_63 = arith.constant 0 : index
    %c0_64 = arith.constant 0 : index
    %93 = vector.load %arg2[%c0_61, %92, %c0_62, %c0_63, %c0_64] : memref<1x8x3x2x256xf32, #tpu.memory_space<vmem>>, vector<1x1x1x2x256xf32>
    %94 = vector.shape_cast %93 : vector<1x1x1x2x256xf32> to vector<2x256xf32>
    %95 = arith.mulf %3, %80 : vector<2x256xf32>
    %96 = arith.subf %80, %94 : vector<2x256xf32>
    %97 = arith.mulf %7, %96 : vector<2x256xf32>
    %98 = arith.addf %95, %97 : vector<2x256xf32>
    %cst_65 = arith.constant 0.000000e+00 : f32
    %99 = vector.broadcast %cst_65 : f32 to vector<2x256xf32>
    %100 = arith.select %32, %98, %99 : vector<2x256xi1>, vector<2x256xf32>
    %c0_66 = arith.constant 0 : index
    %101 = arith.index_cast %c1_i32_43 : i32 to index
    %c0_67 = arith.constant 0 : index
    %c0_68 = arith.constant 0 : index
    %102 = vector.load %arg6[%c0_66, %101, %c0_67, %c0_68] : memref<1x8x2x256xf32, #tpu.memory_space<vmem>>, vector<1x1x2x256xf32>
    %103 = vector.shape_cast %102 : vector<1x1x2x256xf32> to vector<2x256xf32>
    %104 = vector.shape_cast %100 : vector<2x256xf32> to vector<1x1x2x256xf32>
    tpu.vector_store %arg6[%c0_66, %101, %c0_67, %c0_68], %104 {strides = array<i32>} : memref<1x8x2x256xf32, #tpu.memory_space<vmem>>, vector<1x1x2x256xf32>,
    %c240_i32_69 = arith.constant 240 : i32
    %105 = tpu.dynamic_rotate %86 by %c240_i32_69 dim 1 : vector<2x256xf32>, i32 -> vector<2x256xf32>
    %c255_i32_70 = arith.constant 255 : i32
    %106 = tpu.dynamic_rotate %83 by %c255_i32_70 dim 1 : vector<2x256xf32>, i32 -> vector<2x256xf32>
    %107 = arith.subf %105, %86 : vector<2x256xf32>
    %cst_71 = arith.constant 9.99999997E-7 : f32
    %108 = vector.broadcast %cst_71 : f32 to vector<2x256xf32>
    %109 = arith.mulf %107, %108 : vector<2x256xf32>
    %110 = arith.subf %106, %83 : vector<2x256xf32>
    %cst_72 = arith.constant 9.99999997E-7 : f32
    %111 = vector.broadcast %cst_72 : f32 to vector<2x256xf32>
    %112 = arith.mulf %110, %111 : vector<2x256xf32>
    %113 = arith.subf %109, %112 : vector<2x256xf32>
    %cst_73 = arith.constant 9.99999997E-7 : f32
    %114 = vector.broadcast %cst_73 : f32 to vector<2x256xf32>
    %115 = arith.mulf %89, %114 : vector<2x256xf32>
    %116 = arith.subf %113, %115 : vector<2x256xf32>
    %cst_74 = arith.constant 0.000000e+00 : f32
    %117 = vector.broadcast %cst_74 : f32 to vector<2x256xf32>
    %118 = arith.select %32, %116, %117 : vector<2x256xi1>, vector<2x256xf32>
    %c0_75 = arith.constant 0 : index
    %119 = arith.index_cast %c1_i32_43 : i32 to index
    %c0_76 = arith.constant 0 : index
    %c0_77 = arith.constant 0 : index
    %120 = vector.load %arg7[%c0_75, %119, %c0_76, %c0_77] : memref<1x8x2x256xf32, #tpu.memory_space<vmem>>, vector<1x1x2x256xf32>
    %121 = vector.shape_cast %120 : vector<1x1x2x256xf32> to vector<2x256xf32>
    %122 = vector.shape_cast %118 : vector<2x256xf32> to vector<1x1x2x256xf32>
    tpu.vector_store %arg7[%c0_75, %119, %c0_76, %c0_77], %122 {strides = array<i32>} : memref<1x8x2x256xf32, #tpu.memory_space<vmem>>, vector<1x1x2x256xf32>,
    %c2_i32 = arith.constant 2 : i32
    %c0_78 = arith.constant 0 : index
    %123 = arith.index_cast %c2_i32 : i32 to index
    %c0_79 = arith.constant 0 : index
    %c0_80 = arith.constant 0 : index
    %c0_81 = arith.constant 0 : index
    %124 = vector.load %arg2[%c0_78, %123, %c0_79, %c0_80, %c0_81] : memref<1x8x3x2x256xf32, #tpu.memory_space<vmem>>, vector<1x1x1x2x256xf32>
    %125 = vector.shape_cast %124 : vector<1x1x1x2x256xf32> to vector<2x256xf32>
    %c0_82 = arith.constant 0 : index
    %126 = arith.index_cast %c2_i32 : i32 to index
    %c1_83 = arith.constant 1 : index
    %c0_84 = arith.constant 0 : index
    %c0_85 = arith.constant 0 : index
    %127 = vector.load %arg2[%c0_82, %126, %c1_83, %c0_84, %c0_85] : memref<1x8x3x2x256xf32, #tpu.memory_space<vmem>>, vector<1x1x1x2x256xf32>
    %128 = vector.shape_cast %127 : vector<1x1x1x2x256xf32> to vector<2x256xf32>
    %c0_86 = arith.constant 0 : index
    %129 = arith.index_cast %c2_i32 : i32 to index
    %c2_87 = arith.constant 2 : index
    %c0_88 = arith.constant 0 : index
    %c0_89 = arith.constant 0 : index
    %130 = vector.load %arg2[%c0_86, %129, %c2_87, %c0_88, %c0_89] : memref<1x8x3x2x256xf32, #tpu.memory_space<vmem>>, vector<1x1x1x2x256xf32>
    %131 = vector.shape_cast %130 : vector<1x1x1x2x256xf32> to vector<2x256xf32>
    %c0_90 = arith.constant 0 : index
    %132 = arith.index_cast %c2_i32 : i32 to index
    %c0_91 = arith.constant 0 : index
    %c0_92 = arith.constant 0 : index
    %133 = vector.load %arg5[%c0_90, %132, %c0_91, %c0_92] : memref<1x8x2x256xf32, #tpu.memory_space<vmem>>, vector<1x1x2x256xf32>
    %134 = vector.shape_cast %133 : vector<1x1x2x256xf32> to vector<2x256xf32>
    %c1_i32_93 = arith.constant 1 : i32
    %135 = arith.subi %c2_i32, %c1_i32_93 : i32
    %c0_i32_94 = arith.constant 0 : i32
    %136 = arith.maxsi %135, %c0_i32_94 : i32
    %c0_95 = arith.constant 0 : index
    %137 = arith.index_cast %136 : i32 to index
    %c0_96 = arith.constant 0 : index
    %c0_97 = arith.constant 0 : index
    %c0_98 = arith.constant 0 : index
    %138 = vector.load %arg2[%c0_95, %137, %c0_96, %c0_97, %c0_98] : memref<1x8x3x2x256xf32, #tpu.memory_space<vmem>>, vector<1x1x1x2x256xf32>
    %139 = vector.shape_cast %138 : vector<1x1x1x2x256xf32> to vector<2x256xf32>
    %140 = arith.mulf %3, %125 : vector<2x256xf32>
    %141 = arith.subf %125, %139 : vector<2x256xf32>
    %142 = arith.mulf %7, %141 : vector<2x256xf32>
    %143 = arith.addf %140, %142 : vector<2x256xf32>
    %cst_99 = arith.constant 0.000000e+00 : f32
    %144 = vector.broadcast %cst_99 : f32 to vector<2x256xf32>
    %145 = arith.select %32, %143, %144 : vector<2x256xi1>, vector<2x256xf32>
    %c0_100 = arith.constant 0 : index
    %146 = arith.index_cast %c2_i32 : i32 to index
    %c0_101 = arith.constant 0 : index
    %c0_102 = arith.constant 0 : index
    %147 = vector.load %arg6[%c0_100, %146, %c0_101, %c0_102] : memref<1x8x2x256xf32, #tpu.memory_space<vmem>>, vector<1x1x2x256xf32>
    %148 = vector.shape_cast %147 : vector<1x1x2x256xf32> to vector<2x256xf32>
    %149 = vector.shape_cast %145 : vector<2x256xf32> to vector<1x1x2x256xf32>
    tpu.vector_store %arg6[%c0_100, %146, %c0_101, %c0_102], %149 {strides = array<i32>} : memref<1x8x2x256xf32, #tpu.memory_space<vmem>>, vector<1x1x2x256xf32>,
    %c240_i32_103 = arith.constant 240 : i32
    %150 = tpu.dynamic_rotate %131 by %c240_i32_103 dim 1 : vector<2x256xf32>, i32 -> vector<2x256xf32>
    %c255_i32_104 = arith.constant 255 : i32
    %151 = tpu.dynamic_rotate %128 by %c255_i32_104 dim 1 : vector<2x256xf32>, i32 -> vector<2x256xf32>
    %152 = arith.subf %150, %131 : vector<2x256xf32>
    %cst_105 = arith.constant 9.99999997E-7 : f32
    %153 = vector.broadcast %cst_105 : f32 to vector<2x256xf32>
    %154 = arith.mulf %152, %153 : vector<2x256xf32>
    %155 = arith.subf %151, %128 : vector<2x256xf32>
    %cst_106 = arith.constant 9.99999997E-7 : f32
    %156 = vector.broadcast %cst_106 : f32 to vector<2x256xf32>
    %157 = arith.mulf %155, %156 : vector<2x256xf32>
    %158 = arith.subf %154, %157 : vector<2x256xf32>
    %cst_107 = arith.constant 9.99999997E-7 : f32
    %159 = vector.broadcast %cst_107 : f32 to vector<2x256xf32>
    %160 = arith.mulf %134, %159 : vector<2x256xf32>
    %161 = arith.subf %158, %160 : vector<2x256xf32>
    %cst_108 = arith.constant 0.000000e+00 : f32
    %162 = vector.broadcast %cst_108 : f32 to vector<2x256xf32>
    %163 = arith.select %32, %161, %162 : vector<2x256xi1>, vector<2x256xf32>
    %c0_109 = arith.constant 0 : index
    %164 = arith.index_cast %c2_i32 : i32 to index
    %c0_110 = arith.constant 0 : index
    %c0_111 = arith.constant 0 : index
    %165 = vector.load %arg7[%c0_109, %164, %c0_110, %c0_111] : memref<1x8x2x256xf32, #tpu.memory_space<vmem>>, vector<1x1x2x256xf32>
    %166 = vector.shape_cast %165 : vector<1x1x2x256xf32> to vector<2x256xf32>
    %167 = vector.shape_cast %163 : vector<2x256xf32> to vector<1x1x2x256xf32>
    tpu.vector_store %arg7[%c0_109, %164, %c0_110, %c0_111], %167 {strides = array<i32>} : memref<1x8x2x256xf32, #tpu.memory_space<vmem>>, vector<1x1x2x256xf32>,
    %c3_i32 = arith.constant 3 : i32
    %c0_112 = arith.constant 0 : index
    %168 = arith.index_cast %c3_i32 : i32 to index
    %c0_113 = arith.constant 0 : index
    %c0_114 = arith.constant 0 : index
    %c0_115 = arith.constant 0 : index
    %169 = vector.load %arg2[%c0_112, %168, %c0_113, %c0_114, %c0_115] : memref<1x8x3x2x256xf32, #tpu.memory_space<vmem>>, vector<1x1x1x2x256xf32>
    %170 = vector.shape_cast %169 : vector<1x1x1x2x256xf32> to vector<2x256xf32>
    %c0_116 = arith.constant 0 : index
    %171 = arith.index_cast %c3_i32 : i32 to index
    %c1_117 = arith.constant 1 : index
    %c0_118 = arith.constant 0 : index
    %c0_119 = arith.constant 0 : index
    %172 = vector.load %arg2[%c0_116, %171, %c1_117, %c0_118, %c0_119] : memref<1x8x3x2x256xf32, #tpu.memory_space<vmem>>, vector<1x1x1x2x256xf32>
    %173 = vector.shape_cast %172 : vector<1x1x1x2x256xf32> to vector<2x256xf32>
    %c0_120 = arith.constant 0 : index
    %174 = arith.index_cast %c3_i32 : i32 to index
    %c2_121 = arith.constant 2 : index
    %c0_122 = arith.constant 0 : index
    %c0_123 = arith.constant 0 : index
    %175 = vector.load %arg2[%c0_120, %174, %c2_121, %c0_122, %c0_123] : memref<1x8x3x2x256xf32, #tpu.memory_space<vmem>>, vector<1x1x1x2x256xf32>
    %176 = vector.shape_cast %175 : vector<1x1x1x2x256xf32> to vector<2x256xf32>
    %c0_124 = arith.constant 0 : index
    %177 = arith.index_cast %c3_i32 : i32 to index
    %c0_125 = arith.constant 0 : index
    %c0_126 = arith.constant 0 : index
    %178 = vector.load %arg5[%c0_124, %177, %c0_125, %c0_126] : memref<1x8x2x256xf32, #tpu.memory_space<vmem>>, vector<1x1x2x256xf32>
    %179 = vector.shape_cast %178 : vector<1x1x2x256xf32> to vector<2x256xf32>
    %c1_i32_127 = arith.constant 1 : i32
    %180 = arith.subi %c3_i32, %c1_i32_127 : i32
    %c0_i32_128 = arith.constant 0 : i32
    %181 = arith.maxsi %180, %c0_i32_128 : i32
    %c0_129 = arith.constant 0 : index
    %182 = arith.index_cast %181 : i32 to index
    %c0_130 = arith.constant 0 : index
    %c0_131 = arith.constant 0 : index
    %c0_132 = arith.constant 0 : index
    %183 = vector.load %arg2[%c0_129, %182, %c0_130, %c0_131, %c0_132] : memref<1x8x3x2x256xf32, #tpu.memory_space<vmem>>, vector<1x1x1x2x256xf32>
    %184 = vector.shape_cast %183 : vector<1x1x1x2x256xf32> to vector<2x256xf32>
    %185 = arith.mulf %3, %170 : vector<2x256xf32>
    %186 = arith.subf %170, %184 : vector<2x256xf32>
    %187 = arith.mulf %7, %186 : vector<2x256xf32>
    %188 = arith.addf %185, %187 : vector<2x256xf32>
    %cst_133 = arith.constant 0.000000e+00 : f32
    %189 = vector.broadcast %cst_133 : f32 to vector<2x256xf32>
    %190 = arith.select %32, %188, %189 : vector<2x256xi1>, vector<2x256xf32>
    %c0_134 = arith.constant 0 : index
    %191 = arith.index_cast %c3_i32 : i32 to index
    %c0_135 = arith.constant 0 : index
    %c0_136 = arith.constant 0 : index
    %192 = vector.load %arg6[%c0_134, %191, %c0_135, %c0_136] : memref<1x8x2x256xf32, #tpu.memory_space<vmem>>, vector<1x1x2x256xf32>
    %193 = vector.shape_cast %192 : vector<1x1x2x256xf32> to vector<2x256xf32>
    %194 = vector.shape_cast %190 : vector<2x256xf32> to vector<1x1x2x256xf32>
    tpu.vector_store %arg6[%c0_134, %191, %c0_135, %c0_136], %194 {strides = array<i32>} : memref<1x8x2x256xf32, #tpu.memory_space<vmem>>, vector<1x1x2x256xf32>,
    %c240_i32_137 = arith.constant 240 : i32
    %195 = tpu.dynamic_rotate %176 by %c240_i32_137 dim 1 : vector<2x256xf32>, i32 -> vector<2x256xf32>
    %c255_i32_138 = arith.constant 255 : i32
    %196 = tpu.dynamic_rotate %173 by %c255_i32_138 dim 1 : vector<2x256xf32>, i32 -> vector<2x256xf32>
    %197 = arith.subf %195, %176 : vector<2x256xf32>
    %cst_139 = arith.constant 9.99999997E-7 : f32
    %198 = vector.broadcast %cst_139 : f32 to vector<2x256xf32>
    %199 = arith.mulf %197, %198 : vector<2x256xf32>
    %200 = arith.subf %196, %173 : vector<2x256xf32>
    %cst_140 = arith.constant 9.99999997E-7 : f32
    %201 = vector.broadcast %cst_140 : f32 to vector<2x256xf32>
    %202 = arith.mulf %200, %201 : vector<2x256xf32>
    %203 = arith.subf %199, %202 : vector<2x256xf32>
    %cst_141 = arith.constant 9.99999997E-7 : f32
    %204 = vector.broadcast %cst_141 : f32 to vector<2x256xf32>
    %205 = arith.mulf %179, %204 : vector<2x256xf32>
    %206 = arith.subf %203, %205 : vector<2x256xf32>
    %cst_142 = arith.constant 0.000000e+00 : f32
    %207 = vector.broadcast %cst_142 : f32 to vector<2x256xf32>
    %208 = arith.select %32, %206, %207 : vector<2x256xi1>, vector<2x256xf32>
    %c0_143 = arith.constant 0 : index
    %209 = arith.index_cast %c3_i32 : i32 to index
    %c0_144 = arith.constant 0 : index
    %c0_145 = arith.constant 0 : index
    %210 = vector.load %arg7[%c0_143, %209, %c0_144, %c0_145] : memref<1x8x2x256xf32, #tpu.memory_space<vmem>>, vector<1x1x2x256xf32>
    %211 = vector.shape_cast %210 : vector<1x1x2x256xf32> to vector<2x256xf32>
    %212 = vector.shape_cast %208 : vector<2x256xf32> to vector<1x1x2x256xf32>
    tpu.vector_store %arg7[%c0_143, %209, %c0_144, %c0_145], %212 {strides = array<i32>} : memref<1x8x2x256xf32, #tpu.memory_space<vmem>>, vector<1x1x2x256xf32>,
    %c4_i32 = arith.constant 4 : i32
    %c0_146 = arith.constant 0 : index
    %213 = arith.index_cast %c4_i32 : i32 to index
    %c0_147 = arith.constant 0 : index
    %c0_148 = arith.constant 0 : index
    %c0_149 = arith.constant 0 : index
    %214 = vector.load %arg2[%c0_146, %213, %c0_147, %c0_148, %c0_149] : memref<1x8x3x2x256xf32, #tpu.memory_space<vmem>>, vector<1x1x1x2x256xf32>
    %215 = vector.shape_cast %214 : vector<1x1x1x2x256xf32> to vector<2x256xf32>
    %c0_150 = arith.constant 0 : index
    %216 = arith.index_cast %c4_i32 : i32 to index
    %c1_151 = arith.constant 1 : index
    %c0_152 = arith.constant 0 : index
    %c0_153 = arith.constant 0 : index
    %217 = vector.load %arg2[%c0_150, %216, %c1_151, %c0_152, %c0_153] : memref<1x8x3x2x256xf32, #tpu.memory_space<vmem>>, vector<1x1x1x2x256xf32>
    %218 = vector.shape_cast %217 : vector<1x1x1x2x256xf32> to vector<2x256xf32>
    %c0_154 = arith.constant 0 : index
    %219 = arith.index_cast %c4_i32 : i32 to index
    %c2_155 = arith.constant 2 : index
    %c0_156 = arith.constant 0 : index
    %c0_157 = arith.constant 0 : index
    %220 = vector.load %arg2[%c0_154, %219, %c2_155, %c0_156, %c0_157] : memref<1x8x3x2x256xf32, #tpu.memory_space<vmem>>, vector<1x1x1x2x256xf32>
    %221 = vector.shape_cast %220 : vector<1x1x1x2x256xf32> to vector<2x256xf32>
    %c0_158 = arith.constant 0 : index
    %222 = arith.index_cast %c4_i32 : i32 to index
    %c0_159 = arith.constant 0 : index
    %c0_160 = arith.constant 0 : index
    %223 = vector.load %arg5[%c0_158, %222, %c0_159, %c0_160] : memref<1x8x2x256xf32, #tpu.memory_space<vmem>>, vector<1x1x2x256xf32>
    %224 = vector.shape_cast %223 : vector<1x1x2x256xf32> to vector<2x256xf32>
    %c1_i32_161 = arith.constant 1 : i32
    %225 = arith.subi %c4_i32, %c1_i32_161 : i32
    %c0_i32_162 = arith.constant 0 : i32
    %226 = arith.maxsi %225, %c0_i32_162 : i32
    %c0_163 = arith.constant 0 : index
    %227 = arith.index_cast %226 : i32 to index
    %c0_164 = arith.constant 0 : index
    %c0_165 = arith.constant 0 : index
    %c0_166 = arith.constant 0 : index
    %228 = vector.load %arg2[%c0_163, %227, %c0_164, %c0_165, %c0_166] : memref<1x8x3x2x256xf32, #tpu.memory_space<vmem>>, vector<1x1x1x2x256xf32>
    %229 = vector.shape_cast %228 : vector<1x1x1x2x256xf32> to vector<2x256xf32>
    %230 = arith.mulf %3, %215 : vector<2x256xf32>
    %231 = arith.subf %215, %229 : vector<2x256xf32>
    %232 = arith.mulf %7, %231 : vector<2x256xf32>
    %233 = arith.addf %230, %232 : vector<2x256xf32>
    %cst_167 = arith.constant 0.000000e+00 : f32
    %234 = vector.broadcast %cst_167 : f32 to vector<2x256xf32>
    %235 = arith.select %32, %233, %234 : vector<2x256xi1>, vector<2x256xf32>
    %c0_168 = arith.constant 0 : index
    %236 = arith.index_cast %c4_i32 : i32 to index
    %c0_169 = arith.constant 0 : index
    %c0_170 = arith.constant 0 : index
    %237 = vector.load %arg6[%c0_168, %236, %c0_169, %c0_170] : memref<1x8x2x256xf32, #tpu.memory_space<vmem>>, vector<1x1x2x256xf32>
    %238 = vector.shape_cast %237 : vector<1x1x2x256xf32> to vector<2x256xf32>
    %239 = vector.shape_cast %235 : vector<2x256xf32> to vector<1x1x2x256xf32>
    tpu.vector_store %arg6[%c0_168, %236, %c0_169, %c0_170], %239 {strides = array<i32>} : memref<1x8x2x256xf32, #tpu.memory_space<vmem>>, vector<1x1x2x256xf32>,
    %c240_i32_171 = arith.constant 240 : i32
    %240 = tpu.dynamic_rotate %221 by %c240_i32_171 dim 1 : vector<2x256xf32>, i32 -> vector<2x256xf32>
    %c255_i32_172 = arith.constant 255 : i32
    %241 = tpu.dynamic_rotate %218 by %c255_i32_172 dim 1 : vector<2x256xf32>, i32 -> vector<2x256xf32>
    %242 = arith.subf %240, %221 : vector<2x256xf32>
    %cst_173 = arith.constant 9.99999997E-7 : f32
    %243 = vector.broadcast %cst_173 : f32 to vector<2x256xf32>
    %244 = arith.mulf %242, %243 : vector<2x256xf32>
    %245 = arith.subf %241, %218 : vector<2x256xf32>
    %cst_174 = arith.constant 9.99999997E-7 : f32
    %246 = vector.broadcast %cst_174 : f32 to vector<2x256xf32>
    %247 = arith.mulf %245, %246 : vector<2x256xf32>
    %248 = arith.subf %244, %247 : vector<2x256xf32>
    %cst_175 = arith.constant 9.99999997E-7 : f32
    %249 = vector.broadcast %cst_175 : f32 to vector<2x256xf32>
    %250 = arith.mulf %224, %249 : vector<2x256xf32>
    %251 = arith.subf %248, %250 : vector<2x256xf32>
    %cst_176 = arith.constant 0.000000e+00 : f32
    %252 = vector.broadcast %cst_176 : f32 to vector<2x256xf32>
    %253 = arith.select %32, %251, %252 : vector<2x256xi1>, vector<2x256xf32>
    %c0_177 = arith.constant 0 : index
    %254 = arith.index_cast %c4_i32 : i32 to index
    %c0_178 = arith.constant 0 : index
    %c0_179 = arith.constant 0 : index
    %255 = vector.load %arg7[%c0_177, %254, %c0_178, %c0_179] : memref<1x8x2x256xf32, #tpu.memory_space<vmem>>, vector<1x1x2x256xf32>
    %256 = vector.shape_cast %255 : vector<1x1x2x256xf32> to vector<2x256xf32>
    %257 = vector.shape_cast %253 : vector<2x256xf32> to vector<1x1x2x256xf32>
    tpu.vector_store %arg7[%c0_177, %254, %c0_178, %c0_179], %257 {strides = array<i32>} : memref<1x8x2x256xf32, #tpu.memory_space<vmem>>, vector<1x1x2x256xf32>,
    %c5_i32 = arith.constant 5 : i32
    %c0_180 = arith.constant 0 : index
    %258 = arith.index_cast %c5_i32 : i32 to index
    %c0_181 = arith.constant 0 : index
    %c0_182 = arith.constant 0 : index
    %c0_183 = arith.constant 0 : index
    %259 = vector.load %arg2[%c0_180, %258, %c0_181, %c0_182, %c0_183] : memref<1x8x3x2x256xf32, #tpu.memory_space<vmem>>, vector<1x1x1x2x256xf32>
    %260 = vector.shape_cast %259 : vector<1x1x1x2x256xf32> to vector<2x256xf32>
    %c0_184 = arith.constant 0 : index
    %261 = arith.index_cast %c5_i32 : i32 to index
    %c1_185 = arith.constant 1 : index
    %c0_186 = arith.constant 0 : index
    %c0_187 = arith.constant 0 : index
    %262 = vector.load %arg2[%c0_184, %261, %c1_185, %c0_186, %c0_187] : memref<1x8x3x2x256xf32, #tpu.memory_space<vmem>>, vector<1x1x1x2x256xf32>
    %263 = vector.shape_cast %262 : vector<1x1x1x2x256xf32> to vector<2x256xf32>
    %c0_188 = arith.constant 0 : index
    %264 = arith.index_cast %c5_i32 : i32 to index
    %c2_189 = arith.constant 2 : index
    %c0_190 = arith.constant 0 : index
    %c0_191 = arith.constant 0 : index
    %265 = vector.load %arg2[%c0_188, %264, %c2_189, %c0_190, %c0_191] : memref<1x8x3x2x256xf32, #tpu.memory_space<vmem>>, vector<1x1x1x2x256xf32>
    %266 = vector.shape_cast %265 : vector<1x1x1x2x256xf32> to vector<2x256xf32>
    %c0_192 = arith.constant 0 : index
    %267 = arith.index_cast %c5_i32 : i32 to index
    %c0_193 = arith.constant 0 : index
    %c0_194 = arith.constant 0 : index
    %268 = vector.load %arg5[%c0_192, %267, %c0_193, %c0_194] : memref<1x8x2x256xf32, #tpu.memory_space<vmem>>, vector<1x1x2x256xf32>
    %269 = vector.shape_cast %268 : vector<1x1x2x256xf32> to vector<2x256xf32>
    %c1_i32_195 = arith.constant 1 : i32
    %270 = arith.subi %c5_i32, %c1_i32_195 : i32
    %c0_i32_196 = arith.constant 0 : i32
    %271 = arith.maxsi %270, %c0_i32_196 : i32
    %c0_197 = arith.constant 0 : index
    %272 = arith.index_cast %271 : i32 to index
    %c0_198 = arith.constant 0 : index
    %c0_199 = arith.constant 0 : index
    %c0_200 = arith.constant 0 : index
    %273 = vector.load %arg2[%c0_197, %272, %c0_198, %c0_199, %c0_200] : memref<1x8x3x2x256xf32, #tpu.memory_space<vmem>>, vector<1x1x1x2x256xf32>
    %274 = vector.shape_cast %273 : vector<1x1x1x2x256xf32> to vector<2x256xf32>
    %275 = arith.mulf %3, %260 : vector<2x256xf32>
    %276 = arith.subf %260, %274 : vector<2x256xf32>
    %277 = arith.mulf %7, %276 : vector<2x256xf32>
    %278 = arith.addf %275, %277 : vector<2x256xf32>
    %cst_201 = arith.constant 0.000000e+00 : f32
    %279 = vector.broadcast %cst_201 : f32 to vector<2x256xf32>
    %280 = arith.select %32, %278, %279 : vector<2x256xi1>, vector<2x256xf32>
    %c0_202 = arith.constant 0 : index
    %281 = arith.index_cast %c5_i32 : i32 to index
    %c0_203 = arith.constant 0 : index
    %c0_204 = arith.constant 0 : index
    %282 = vector.load %arg6[%c0_202, %281, %c0_203, %c0_204] : memref<1x8x2x256xf32, #tpu.memory_space<vmem>>, vector<1x1x2x256xf32>
    %283 = vector.shape_cast %282 : vector<1x1x2x256xf32> to vector<2x256xf32>
    %284 = vector.shape_cast %280 : vector<2x256xf32> to vector<1x1x2x256xf32>
    tpu.vector_store %arg6[%c0_202, %281, %c0_203, %c0_204], %284 {strides = array<i32>} : memref<1x8x2x256xf32, #tpu.memory_space<vmem>>, vector<1x1x2x256xf32>,
    %c240_i32_205 = arith.constant 240 : i32
    %285 = tpu.dynamic_rotate %266 by %c240_i32_205 dim 1 : vector<2x256xf32>, i32 -> vector<2x256xf32>
    %c255_i32_206 = arith.constant 255 : i32
    %286 = tpu.dynamic_rotate %263 by %c255_i32_206 dim 1 : vector<2x256xf32>, i32 -> vector<2x256xf32>
    %287 = arith.subf %285, %266 : vector<2x256xf32>
    %cst_207 = arith.constant 9.99999997E-7 : f32
    %288 = vector.broadcast %cst_207 : f32 to vector<2x256xf32>
    %289 = arith.mulf %287, %288 : vector<2x256xf32>
    %290 = arith.subf %286, %263 : vector<2x256xf32>
    %cst_208 = arith.constant 9.99999997E-7 : f32
    %291 = vector.broadcast %cst_208 : f32 to vector<2x256xf32>
    %292 = arith.mulf %290, %291 : vector<2x256xf32>
    %293 = arith.subf %289, %292 : vector<2x256xf32>
    %cst_209 = arith.constant 9.99999997E-7 : f32
    %294 = vector.broadcast %cst_209 : f32 to vector<2x256xf32>
    %295 = arith.mulf %269, %294 : vector<2x256xf32>
    %296 = arith.subf %293, %295 : vector<2x256xf32>
    %cst_210 = arith.constant 0.000000e+00 : f32
    %297 = vector.broadcast %cst_210 : f32 to vector<2x256xf32>
    %298 = arith.select %32, %296, %297 : vector<2x256xi1>, vector<2x256xf32>
    %c0_211 = arith.constant 0 : index
    %299 = arith.index_cast %c5_i32 : i32 to index
    %c0_212 = arith.constant 0 : index
    %c0_213 = arith.constant 0 : index
    %300 = vector.load %arg7[%c0_211, %299, %c0_212, %c0_213] : memref<1x8x2x256xf32, #tpu.memory_space<vmem>>, vector<1x1x2x256xf32>
    %301 = vector.shape_cast %300 : vector<1x1x2x256xf32> to vector<2x256xf32>
    %302 = vector.shape_cast %298 : vector<2x256xf32> to vector<1x1x2x256xf32>
    tpu.vector_store %arg7[%c0_211, %299, %c0_212, %c0_213], %302 {strides = array<i32>} : memref<1x8x2x256xf32, #tpu.memory_space<vmem>>, vector<1x1x2x256xf32>,
    %c6_i32 = arith.constant 6 : i32
    %c0_214 = arith.constant 0 : index
    %303 = arith.index_cast %c6_i32 : i32 to index
    %c0_215 = arith.constant 0 : index
    %c0_216 = arith.constant 0 : index
    %c0_217 = arith.constant 0 : index
    %304 = vector.load %arg2[%c0_214, %303, %c0_215, %c0_216, %c0_217] : memref<1x8x3x2x256xf32, #tpu.memory_space<vmem>>, vector<1x1x1x2x256xf32>
    %305 = vector.shape_cast %304 : vector<1x1x1x2x256xf32> to vector<2x256xf32>
    %c0_218 = arith.constant 0 : index
    %306 = arith.index_cast %c6_i32 : i32 to index
    %c1_219 = arith.constant 1 : index
    %c0_220 = arith.constant 0 : index
    %c0_221 = arith.constant 0 : index
    %307 = vector.load %arg2[%c0_218, %306, %c1_219, %c0_220, %c0_221] : memref<1x8x3x2x256xf32, #tpu.memory_space<vmem>>, vector<1x1x1x2x256xf32>
    %308 = vector.shape_cast %307 : vector<1x1x1x2x256xf32> to vector<2x256xf32>
    %c0_222 = arith.constant 0 : index
    %309 = arith.index_cast %c6_i32 : i32 to index
    %c2_223 = arith.constant 2 : index
    %c0_224 = arith.constant 0 : index
    %c0_225 = arith.constant 0 : index
    %310 = vector.load %arg2[%c0_222, %309, %c2_223, %c0_224, %c0_225] : memref<1x8x3x2x256xf32, #tpu.memory_space<vmem>>, vector<1x1x1x2x256xf32>
    %311 = vector.shape_cast %310 : vector<1x1x1x2x256xf32> to vector<2x256xf32>
    %c0_226 = arith.constant 0 : index
    %312 = arith.index_cast %c6_i32 : i32 to index
    %c0_227 = arith.constant 0 : index
    %c0_228 = arith.constant 0 : index
    %313 = vector.load %arg5[%c0_226, %312, %c0_227, %c0_228] : memref<1x8x2x256xf32, #tpu.memory_space<vmem>>, vector<1x1x2x256xf32>
    %314 = vector.shape_cast %313 : vector<1x1x2x256xf32> to vector<2x256xf32>
    %c1_i32_229 = arith.constant 1 : i32
    %315 = arith.subi %c6_i32, %c1_i32_229 : i32
    %c0_i32_230 = arith.constant 0 : i32
    %316 = arith.maxsi %315, %c0_i32_230 : i32
    %c0_231 = arith.constant 0 : index
    %317 = arith.index_cast %316 : i32 to index
    %c0_232 = arith.constant 0 : index
    %c0_233 = arith.constant 0 : index
    %c0_234 = arith.constant 0 : index
    %318 = vector.load %arg2[%c0_231, %317, %c0_232, %c0_233, %c0_234] : memref<1x8x3x2x256xf32, #tpu.memory_space<vmem>>, vector<1x1x1x2x256xf32>
    %319 = vector.shape_cast %318 : vector<1x1x1x2x256xf32> to vector<2x256xf32>
    %320 = arith.mulf %3, %305 : vector<2x256xf32>
    %321 = arith.subf %305, %319 : vector<2x256xf32>
    %322 = arith.mulf %7, %321 : vector<2x256xf32>
    %323 = arith.addf %320, %322 : vector<2x256xf32>
    %cst_235 = arith.constant 0.000000e+00 : f32
    %324 = vector.broadcast %cst_235 : f32 to vector<2x256xf32>
    %325 = arith.select %32, %323, %324 : vector<2x256xi1>, vector<2x256xf32>
    %c0_236 = arith.constant 0 : index
    %326 = arith.index_cast %c6_i32 : i32 to index
    %c0_237 = arith.constant 0 : index
    %c0_238 = arith.constant 0 : index
    %327 = vector.load %arg6[%c0_236, %326, %c0_237, %c0_238] : memref<1x8x2x256xf32, #tpu.memory_space<vmem>>, vector<1x1x2x256xf32>
    %328 = vector.shape_cast %327 : vector<1x1x2x256xf32> to vector<2x256xf32>
    %329 = vector.shape_cast %325 : vector<2x256xf32> to vector<1x1x2x256xf32>
    tpu.vector_store %arg6[%c0_236, %326, %c0_237, %c0_238], %329 {strides = array<i32>} : memref<1x8x2x256xf32, #tpu.memory_space<vmem>>, vector<1x1x2x256xf32>,
    %c240_i32_239 = arith.constant 240 : i32
    %330 = tpu.dynamic_rotate %311 by %c240_i32_239 dim 1 : vector<2x256xf32>, i32 -> vector<2x256xf32>
    %c255_i32_240 = arith.constant 255 : i32
    %331 = tpu.dynamic_rotate %308 by %c255_i32_240 dim 1 : vector<2x256xf32>, i32 -> vector<2x256xf32>
    %332 = arith.subf %330, %311 : vector<2x256xf32>
    %cst_241 = arith.constant 9.99999997E-7 : f32
    %333 = vector.broadcast %cst_241 : f32 to vector<2x256xf32>
    %334 = arith.mulf %332, %333 : vector<2x256xf32>
    %335 = arith.subf %331, %308 : vector<2x256xf32>
    %cst_242 = arith.constant 9.99999997E-7 : f32
    %336 = vector.broadcast %cst_242 : f32 to vector<2x256xf32>
    %337 = arith.mulf %335, %336 : vector<2x256xf32>
    %338 = arith.subf %334, %337 : vector<2x256xf32>
    %cst_243 = arith.constant 9.99999997E-7 : f32
    %339 = vector.broadcast %cst_243 : f32 to vector<2x256xf32>
    %340 = arith.mulf %314, %339 : vector<2x256xf32>
    %341 = arith.subf %338, %340 : vector<2x256xf32>
    %cst_244 = arith.constant 0.000000e+00 : f32
    %342 = vector.broadcast %cst_244 : f32 to vector<2x256xf32>
    %343 = arith.select %32, %341, %342 : vector<2x256xi1>, vector<2x256xf32>
    %c0_245 = arith.constant 0 : index
    %344 = arith.index_cast %c6_i32 : i32 to index
    %c0_246 = arith.constant 0 : index
    %c0_247 = arith.constant 0 : index
    %345 = vector.load %arg7[%c0_245, %344, %c0_246, %c0_247] : memref<1x8x2x256xf32, #tpu.memory_space<vmem>>, vector<1x1x2x256xf32>
    %346 = vector.shape_cast %345 : vector<1x1x2x256xf32> to vector<2x256xf32>
    %347 = vector.shape_cast %343 : vector<2x256xf32> to vector<1x1x2x256xf32>
    tpu.vector_store %arg7[%c0_245, %344, %c0_246, %c0_247], %347 {strides = array<i32>} : memref<1x8x2x256xf32, #tpu.memory_space<vmem>>, vector<1x1x2x256xf32>,
    %c7_i32 = arith.constant 7 : i32
    %c0_248 = arith.constant 0 : index
    %348 = arith.index_cast %c7_i32 : i32 to index
    %c0_249 = arith.constant 0 : index
    %c0_250 = arith.constant 0 : index
    %c0_251 = arith.constant 0 : index
    %349 = vector.load %arg2[%c0_248, %348, %c0_249, %c0_250, %c0_251] : memref<1x8x3x2x256xf32, #tpu.memory_space<vmem>>, vector<1x1x1x2x256xf32>
    %350 = vector.shape_cast %349 : vector<1x1x1x2x256xf32> to vector<2x256xf32>
    %c0_252 = arith.constant 0 : index
    %351 = arith.index_cast %c7_i32 : i32 to index
    %c1_253 = arith.constant 1 : index
    %c0_254 = arith.constant 0 : index
    %c0_255 = arith.constant 0 : index
    %352 = vector.load %arg2[%c0_252, %351, %c1_253, %c0_254, %c0_255] : memref<1x8x3x2x256xf32, #tpu.memory_space<vmem>>, vector<1x1x1x2x256xf32>
    %353 = vector.shape_cast %352 : vector<1x1x1x2x256xf32> to vector<2x256xf32>
    %c0_256 = arith.constant 0 : index
    %354 = arith.index_cast %c7_i32 : i32 to index
    %c2_257 = arith.constant 2 : index
    %c0_258 = arith.constant 0 : index
    %c0_259 = arith.constant 0 : index
    %355 = vector.load %arg2[%c0_256, %354, %c2_257, %c0_258, %c0_259] : memref<1x8x3x2x256xf32, #tpu.memory_space<vmem>>, vector<1x1x1x2x256xf32>
    %356 = vector.shape_cast %355 : vector<1x1x1x2x256xf32> to vector<2x256xf32>
    %c0_260 = arith.constant 0 : index
    %357 = arith.index_cast %c7_i32 : i32 to index
    %c0_261 = arith.constant 0 : index
    %c0_262 = arith.constant 0 : index
    %358 = vector.load %arg5[%c0_260, %357, %c0_261, %c0_262] : memref<1x8x2x256xf32, #tpu.memory_space<vmem>>, vector<1x1x2x256xf32>
    %359 = vector.shape_cast %358 : vector<1x1x2x256xf32> to vector<2x256xf32>
    %c1_i32_263 = arith.constant 1 : i32
    %360 = arith.subi %c7_i32, %c1_i32_263 : i32
    %c0_i32_264 = arith.constant 0 : i32
    %361 = arith.maxsi %360, %c0_i32_264 : i32
    %c0_265 = arith.constant 0 : index
    %362 = arith.index_cast %361 : i32 to index
    %c0_266 = arith.constant 0 : index
    %c0_267 = arith.constant 0 : index
    %c0_268 = arith.constant 0 : index
    %363 = vector.load %arg2[%c0_265, %362, %c0_266, %c0_267, %c0_268] : memref<1x8x3x2x256xf32, #tpu.memory_space<vmem>>, vector<1x1x1x2x256xf32>
    %364 = vector.shape_cast %363 : vector<1x1x1x2x256xf32> to vector<2x256xf32>
    %365 = arith.mulf %3, %350 : vector<2x256xf32>
    %366 = arith.subf %350, %364 : vector<2x256xf32>
    %367 = arith.mulf %7, %366 : vector<2x256xf32>
    %368 = arith.addf %365, %367 : vector<2x256xf32>
    %cst_269 = arith.constant 0.000000e+00 : f32
    %369 = vector.broadcast %cst_269 : f32 to vector<2x256xf32>
    %370 = arith.select %32, %368, %369 : vector<2x256xi1>, vector<2x256xf32>
    %c0_270 = arith.constant 0 : index
    %371 = arith.index_cast %c7_i32 : i32 to index
    %c0_271 = arith.constant 0 : index
    %c0_272 = arith.constant 0 : index
    %372 = vector.load %arg6[%c0_270, %371, %c0_271, %c0_272] : memref<1x8x2x256xf32, #tpu.memory_space<vmem>>, vector<1x1x2x256xf32>
    %373 = vector.shape_cast %372 : vector<1x1x2x256xf32> to vector<2x256xf32>
    %374 = vector.shape_cast %370 : vector<2x256xf32> to vector<1x1x2x256xf32>
    tpu.vector_store %arg6[%c0_270, %371, %c0_271, %c0_272], %374 {strides = array<i32>} : memref<1x8x2x256xf32, #tpu.memory_space<vmem>>, vector<1x1x2x256xf32>,
    %c240_i32_273 = arith.constant 240 : i32
    %375 = tpu.dynamic_rotate %356 by %c240_i32_273 dim 1 : vector<2x256xf32>, i32 -> vector<2x256xf32>
    %c255_i32_274 = arith.constant 255 : i32
    %376 = tpu.dynamic_rotate %353 by %c255_i32_274 dim 1 : vector<2x256xf32>, i32 -> vector<2x256xf32>
    %377 = arith.subf %375, %356 : vector<2x256xf32>
    %cst_275 = arith.constant 9.99999997E-7 : f32
    %378 = vector.broadcast %cst_275 : f32 to vector<2x256xf32>
    %379 = arith.mulf %377, %378 : vector<2x256xf32>
    %380 = arith.subf %376, %353 : vector<2x256xf32>
    %cst_276 = arith.constant 9.99999997E-7 : f32
    %381 = vector.broadcast %cst_276 : f32 to vector<2x256xf32>
    %382 = arith.mulf %380, %381 : vector<2x256xf32>
    %383 = arith.subf %379, %382 : vector<2x256xf32>
    %cst_277 = arith.constant 9.99999997E-7 : f32
    %384 = vector.broadcast %cst_277 : f32 to vector<2x256xf32>
    %385 = arith.mulf %359, %384 : vector<2x256xf32>
    %386 = arith.subf %383, %385 : vector<2x256xf32>
    %cst_278 = arith.constant 0.000000e+00 : f32
    %387 = vector.broadcast %cst_278 : f32 to vector<2x256xf32>
    %388 = arith.select %32, %386, %387 : vector<2x256xi1>, vector<2x256xf32>
    %c0_279 = arith.constant 0 : index
    %389 = arith.index_cast %c7_i32 : i32 to index
    %c0_280 = arith.constant 0 : index
    %c0_281 = arith.constant 0 : index
    %390 = vector.load %arg7[%c0_279, %389, %c0_280, %c0_281] : memref<1x8x2x256xf32, #tpu.memory_space<vmem>>, vector<1x1x2x256xf32>
    %391 = vector.shape_cast %390 : vector<1x1x2x256xf32> to vector<2x256xf32>
    %392 = vector.shape_cast %388 : vector<2x256xf32> to vector<1x1x2x256xf32>
    tpu.vector_store %arg7[%c0_279, %389, %c0_280, %c0_281], %392 {strides = array<i32>} : memref<1x8x2x256xf32, #tpu.memory_space<vmem>>, vector<1x1x2x256xf32>,
    %c8_i32 = arith.constant 8 : i32
    return
  }
  func.func @transform_0(%arg0: i32, %arg1: i32) -> (i32, i32, i32, i32, i32) {
    %c0_i32 = arith.constant 0 : i32
    %c0_i32_0 = arith.constant 0 : i32
    %c0_i32_1 = arith.constant 0 : i32
    %c0_i32_2 = arith.constant 0 : i32
    return %arg0, %arg1, %c0_i32, %c0_i32_0, %c0_i32_1 : i32, i32, i32, i32, i32
  }
  func.func @transform_1(%arg0: i32, %arg1: i32) -> (i32, i32, i32, i32) {
    %c5_i32 = arith.constant 5 : i32
    %c0_i32 = arith.constant 0 : i32
    %c0_i32_0 = arith.constant 0 : i32
    %c0_i32_1 = arith.constant 0 : i32
    return %arg0, %c5_i32, %c0_i32, %c0_i32_0 : i32, i32, i32, i32
  }
  func.func @transform_2(%arg0: i32, %arg1: i32) -> (i32, i32, i32, i32) {
    %c2_i32 = arith.constant 2 : i32
    %c0_i32 = arith.constant 0 : i32
    %c0_i32_0 = arith.constant 0 : i32
    %c0_i32_1 = arith.constant 0 : i32
    return %arg0, %c2_i32, %c0_i32, %c0_i32_0 : i32, i32, i32, i32
  }
  func.func @transform_3(%arg0: i32, %arg1: i32) -> (i32, i32, i32, i32) {
    %c0_i32 = arith.constant 0 : i32
    %c0_i32_0 = arith.constant 0 : i32
    %c0_i32_1 = arith.constant 0 : i32
    return %arg0, %arg1, %c0_i32, %c0_i32_0 : i32, i32, i32, i32
  }
  func.func @transform_4(%arg0: i32, %arg1: i32) -> (i32, i32, i32, i32) {
    %c0_i32 = arith.constant 0 : i32
    %c0_i32_0 = arith.constant 0 : i32
    %c0_i32_1 = arith.constant 0 : i32
    return %arg0, %arg1, %c0_i32, %c0_i32_0 : i32, i32, i32, i32
  }
  func.func @transform_5(%arg0: i32, %arg1: i32) -> (i32, i32, i32, i32) {
    %c0_i32 = arith.constant 0 : i32
    %c0_i32_0 = arith.constant 0 : i32
    %c0_i32_1 = arith.constant 0 : i32
    return %arg0, %arg1, %c0_i32, %c0_i32_0 : i32, i32, i32, i32
  }
}

</mosaic_0001>

<llo_original>
// kernel: tpu_custom_call.1
$region0: #{tpu_custom_call.1}
  #allocation0 [shape = 'u32[]', space=smem, size = 0x4, offset = 0x4, fixed_abs, tag = 'smem constant byte address 0x4 - core index']
  #allocation1 [shape = 'u32[144,128]{1,0:T(1,128)}', space=vmem, size = 0x12000, scoped, tag = 'internal scratch']
  #allocation2 [shape = 'f32[2,256]{1,0:T(2,128)}', space=vmem, size = 0x800, scoped, tag = 'scratch operand']
  %s0 = inlined_call_operand.hbm [shape: f32[2,8,3,2,256], index: 0, kind: input, shape index: {}]
  %s1 = inlined_call_operand.hbm [shape: f32[2,6,2,256], index: 1, kind: input, shape index: {}]
  %s2 = inlined_call_operand.hbm [shape: f32[2,6,2,256], index: 2, kind: input, shape index: {}]
  %s3 = inlined_call_operand.hbm [shape: f32[2,8,2,256], index: 3, kind: input, shape index: {}]
  %s4 = inlined_call_operand.hbm [shape: f32[2,8,2,256], index: 4, kind: output, shape index: {0}]
  %s5 = inlined_call_operand.hbm [shape: f32[2,8,2,256], index: 5, kind: output, shape index: {1}]
  %6 = xla_tuple %s4, %s5
  %s7 = sld [smem:[#allocation0]]
  $region73: #{tpu_custom_call.1} parent=0
    _
  %s9 = ssub.s32 1, %s7
  %s10 = scalar_select 0, %s9, %s7
  $region1: #{tpu_custom_call.1} parent=0
    #allocation3 [shape = 'u8[98304]{0}', space=vmem, size = 0x18000, scoped, tag = 'input window, operand 0']
    #allocation4 [shape = 's32[2]{0}', space=sflag, size = 0x8, scoped, tag = 'scoped memory for tpu_custom_call.1']
    #allocation5 [shape = 's32[2]{0}', space=sflag, size = 0x8, scoped, tag = 'scoped memory for tpu_custom_call.1']
    #allocation6 [shape = 'u8[4096]{0}', space=vmem, size = 0x1000, scoped, tag = 'input window, operand 1']
    #allocation7 [shape = 's32[2]{0}', space=sflag, size = 0x8, scoped, tag = 'scoped memory for tpu_custom_call.1']
    #allocation8 [shape = 'u8[4096]{0}', space=vmem, size = 0x1000, scoped, tag = 'input window, operand 2']
    #allocation9 [shape = 'u8[32768]{0}', space=vmem, size = 0x8000, scoped, tag = 'input window, operand 3']
    #allocation10 [shape = 's32[2]{0}', space=sflag, size = 0x8, scoped, tag = 'scoped memory for tpu_custom_call.1']
    #allocation11 [shape = 'u8[32768]{0}', space=vmem, size = 0x8000, scoped, tag = 'output window, operand 0']
    #allocation12 [shape = 'u8[32768]{0}', space=vmem, size = 0x8000, scoped, tag = 'output window, operand 1']
    #allocation13 [shape = 's32[2]{0}', space=sflag, size = 0x8, scoped, tag = 'scoped memory for tpu_custom_call.1']
    %11 = vsyncpa [#allocation4], 0
    %s12 = scalar_lea.sflag [#allocation4], 1
    %13 = vsyncpa %s12, 0
    %14 = vsyncpa [#allocation7], 0
    %s15 = scalar_lea.sflag [#allocation7], 1
    %16 = vsyncpa %s15, 0
    %17 = vsyncpa [#allocation10], 0
    %s18 = scalar_lea.sflag [#allocation10], 1
    %19 = vsyncpa %s18, 0
    %20 = vsyncpa [#allocation5], 0
    %s21 = scalar_lea.sflag [#allocation5], 1
    %22 = vsyncpa %s21, 0
    %23 = vsyncpa [#allocation13], 0
    %s24 = scalar_lea.sflag [#allocation13], 1
    %25 = vsyncpa %s24, 0
    loop: start=0, step=1, limit=4
    $region2: #{tpu_custom_call.1} parent=1 // loop_pre_header
      _
    $region3: #{tpu_custom_call.1} parent=1 // loop_header
      %s27 = sphi 0, %s31
      %p28 = scmp.ge.s32.totalorder %s27, 4
      %s34 = sphi 0, %s46
      %s35 = sphi 0, %s42
      %s36 = sphi 0, %s34
      %s37 = sphi 0, %s35
      %s38 = sphi 0, %s36
      %s39 = sphi 0, %s37
      %s51 = sphi 0, %s53
      %s54 = sphi 0, %s51
      %s55 = sphi 0, %s54
      %s71 = sphi 0, %s55
      %s77 = sphi 0, %s79
      %s80 = sphi 0, %s77
      %s81 = sphi 0, %s80
      %s97 = sphi 0, %s81
      %s103 = sphi 0, %s105
      %s106 = sphi 0, %s103
      %s107 = sphi 0, %s106
      %s123 = sphi 0, %s107
      %s131 = sphi 0, %s133
      %s134 = sphi 0, %s131
      %s135 = sphi 0, %s134
      %s151 = sphi 0, %s135
      %s159 = sphi 0, %s161
      %s162 = sphi 0, %s159
      %s163 = sphi 0, %s162
      %s179 = sphi 0, %s163
      %s187 = sphi 0, %s189
      %s190 = sphi 0, %s187
      %s191 = sphi 0, %s190
      %s207 = sphi 0, %s191
    $region4: #{tpu_custom_call.1} parent=1 // loop_header_branch
      %30 = sbr.rel (%p28) target = $region8
    $region5: #{tpu_custom_call.1} parent=1 // loop_body
      %s32 = ssub.s32 %s27, 1
      %s33 = ssub.s32 %s27, 2
      %s40 = sadd.s32 1, %s35
      %p41 = scmp.ge.s32.totalorder %s40, 1
      %s42 = scalar_select %p41, 0, %s40
      %s43 = sadd.s32 1, %s34
      %s44 = scalar_select %p41, %s43, %s34
      %p45 = scmp.ge.s32.totalorder %s44, 2
      %s46 = scalar_select %p45, 0, %s44
      %s47 = ssub.s32 %s34, %s46
      %s48 = ssub.s32 %s35, %s42
      %s49 = sor.u32 %s47, %s48
      %p50 = scmp.eq.s32.totalorder %s49, 0
      %s52 = sadd.s32 %s51, 1
      %s53 = scalar_select %p50, %s51, %s52
      %p56 = pneg %p50
      %p57 = scmp.eq.s32.totalorder %s27, 1
      %p58 = por %p56, %p57
      %p59 = scmp.ne.s32.totalorder %s51, %s54
      %p60 = scmp.eq.s32.totalorder %s27, 0
      %p61 = por %p59, %p60
      %p62 = scmp.ne.s32.totalorder %s51, %s54
      %p63 = scmp.eq.s32.totalorder %s32, 1
      %p64 = por %p62, %p63
      %p65 = scmp.ne.s32.totalorder %s54, %s55
      %p66 = scmp.eq.s32.totalorder %s32, 0
      %p67 = por %p65, %p66
      %p68 = scmp.ne.s32.totalorder %s54, %s55
      %p69 = scmp.eq.s32.totalorder %s33, 1
      %p70 = por %p68, %p69
      %p72 = scmp.ne.s32.totalorder %s55, %s71
      %p73 = scmp.eq.s32.totalorder %s33, 0
      %p74 = por %p72, %p73
      %s75 = ssub.s32 %s34, %s46
      %p76 = scmp.eq.s32.totalorder %s75, 0
      %s78 = sadd.s32 %s77, 1
      %s79 = scalar_select %p76, %s77, %s78
      %p82 = pneg %p76
      %p83 = scmp.eq.s32.totalorder %s27, 1
      %p84 = por %p82, %p83
      %p85 = scmp.ne.s32.totalorder %s77, %s80
      %p86 = scmp.eq.s32.totalorder %s27, 0
      %p87 = por %p85, %p86
      %p88 = scmp.ne.s32.totalorder %s77, %s80
      %p89 = scmp.eq.s32.totalorder %s32, 1
      %p90 = por %p88, %p89
      %p91 = scmp.ne.s32.totalorder %s80, %s81
      %p92 = scmp.eq.s32.totalorder %s32, 0
      %p93 = por %p91, %p92
      %p94 = scmp.ne.s32.totalorder %s80, %s81
      %p95 = scmp.eq.s32.totalorder %s33, 1
      %p96 = por %p94, %p95
      %p98 = scmp.ne.s32.totalorder %s81, %s97
      %p99 = scmp.eq.s32.totalorder %s33, 0
      %p100 = por %p98, %p99
      %s101 = ssub.s32 %s34, %s46
      %p102 = scmp.eq.s32.totalorder %s101, 0
      %s104 = sadd.s32 %s103, 1
      %s105 = scalar_select %p102, %s103, %s104
      %p108 = pneg %p102
      %p109 = scmp.eq.s32.totalorder %s27, 1
      %p110 = por %p108, %p109
      %p111 = scmp.ne.s32.totalorder %s103, %s106
      %p112 = scmp.eq.s32.totalorder %s27, 0
      %p113 = por %p111, %p112
      %p114 = scmp.ne.s32.totalorder %s103, %s106
      %p115 = scmp.eq.s32.totalorder %s32, 1
      %p116 = por %p114, %p115
      %p117 = scmp.ne.s32.totalorder %s106, %s107
      %p118 = scmp.eq.s32.totalorder %s32, 0
      %p119 = por %p117, %p118
      %p120 = scmp.ne.s32.totalorder %s106, %s107
      %p121 = scmp.eq.s32.totalorder %s33, 1
      %p122 = por %p120, %p121
      %p124 = scmp.ne.s32.totalorder %s107, %s123
      %p125 = scmp.eq.s32.totalorder %s33, 0
      %p126 = por %p124, %p125
      %s127 = ssub.s32 %s34, %s46
      %s128 = ssub.s32 %s35, %s42
      %s129 = sor.u32 %s127, %s128
      %p130 = scmp.eq.s32.totalorder %s129, 0
      %s132 = sadd.s32 %s131, 1
      %s133 = scalar_select %p130, %s131, %s132
      %p136 = pneg %p130
      %p137 = scmp.eq.s32.totalorder %s27, 1
      %p138 = por %p136, %p137
      %p139 = scmp.ne.s32.totalorder %s131, %s134
      %p140 = scmp.eq.s32.totalorder %s27, 0
      %p141 = por %p139, %p140
      %p142 = scmp.ne.s32.totalorder %s131, %s134
      %p143 = scmp.eq.s32.totalorder %s32, 1
      %p144 = por %p142, %p143
      %p145 = scmp.ne.s32.totalorder %s134, %s135
      %p146 = scmp.eq.s32.totalorder %s32, 0
      %p147 = por %p145, %p146
      %p148 = scmp.ne.s32.totalorder %s134, %s135
      %p149 = scmp.eq.s32.totalorder %s33, 1
      %p150 = por %p148, %p149
      %p152 = scmp.ne.s32.totalorder %s135, %s151
      %p153 = scmp.eq.s32.totalorder %s33, 0
      %p154 = por %p152, %p153
      %s155 = ssub.s32 %s34, %s46
      %s156 = ssub.s32 %s35, %s42
      %s157 = sor.u32 %s155, %s156
      %p158 = scmp.eq.s32.totalorder %s157, 0
      %s160 = sadd.s32 %s159, 1
      %s161 = scalar_select %p158, %s159, %s160
      %p164 = pneg %p158
      %p165 = scmp.eq.s32.totalorder %s27, 1
      %p166 = por %p164, %p165
      %p167 = scmp.ne.s32.totalorder %s159, %s162
      %p168 = scmp.eq.s32.totalorder %s27, 0
      %p169 = por %p167, %p168
      %p170 = scmp.ne.s32.totalorder %s159, %s162
      %p171 = scmp.eq.s32.totalorder %s32, 1
      %p172 = por %p170, %p171
      %p173 = scmp.ne.s32.totalorder %s162, %s163
      %p174 = scmp.eq.s32.totalorder %s32, 0
      %p175 = por %p173, %p174
      %p176 = scmp.ne.s32.totalorder %s162, %s163
      %p177 = scmp.eq.s32.totalorder %s33, 1
      %p178 = por %p176, %p177
      %p180 = scmp.ne.s32.totalorder %s163, %s179
      %p181 = scmp.eq.s32.totalorder %s33, 0
      %p182 = por %p180, %p181
      %s183 = ssub.s32 %s34, %s46
      %s184 = ssub.s32 %s35, %s42
      %s185 = sor.u32 %s183, %s184
      %p186 = scmp.eq.s32.totalorder %s185, 0
      %s188 = sadd.s32 %s187, 1
      %s189 = scalar_select %p186, %s187, %s188
      %p192 = pneg %p186
      %p193 = scmp.eq.s32.totalorder %s27, 1
      %p194 = por %p192, %p193
      %p195 = scmp.ne.s32.totalorder %s187, %s190
      %p196 = scmp.eq.s32.totalorder %s27, 0
      %p197 = por %p195, %p196
      %p198 = scmp.ne.s32.totalorder %s187, %s190
      %p199 = scmp.eq.s32.totalorder %s32, 1
      %p200 = por %p198, %p199
      %p201 = scmp.ne.s32.totalorder %s190, %s191
      %p202 = scmp.eq.s32.totalorder %s32, 0
      %p203 = por %p201, %p202
      %p204 = scmp.ne.s32.totalorder %s190, %s191
      %p205 = scmp.eq.s32.totalorder %s33, 1
      %p206 = por %p204, %p205
      %p208 = scmp.ne.s32.totalorder %s191, %s207
      %p209 = scmp.eq.s32.totalorder %s33, 0
      %p210 = por %p208, %p209
      %p211 = scmp.le.s32.totalorder 1, %s27
      %p212 = scmp.lt.s32.totalorder %s27, 3
      %p213 = pnand %p211, %p212
      %p214 = pneg %p213
      // Predicated region
      $region9: #{tpu_custom_call.1} parent=5 // pred_check
        _
      $region10: #{tpu_custom_call.1} parent=5 // pred_check_branch
        %216 = sbr.rel (%p213) target = $region12
      $region11: #{tpu_custom_call.1} parent=5 // pred_region
        %s217 = ssub.s32 %s27, 1
      $region12: #{tpu_custom_call.1} parent=5 // pred_fallthru
        _
      %p218 = scmp.lt.s32.totalorder %s27, 2
      // Predicated region
      $region13: #{tpu_custom_call.1} parent=5 // pred_check
        %p219 = pneg %p218
      $region14: #{tpu_custom_call.1} parent=5 // pred_check_branch
        %221 = sbr.rel (%p219) target = $region16
      $region15: #{tpu_custom_call.1} parent=5 // pred_region
        // Predicated region
        $region17: #{tpu_custom_call.1} parent=15 // pred_check
          %p222 = pneg %p61
        $region18: #{tpu_custom_call.1} parent=15 // pred_check_branch
          %224 = sbr.rel (%p222) target = $region20
        $region19: #{tpu_custom_call.1} parent=15 // pred_region
          %s225 = sand.u32 %s51, 1
          %s226 = scalar_lea.sflag [#allocation4], %s225
          %s227 = sand.u32 %s51, 1
          %s228 = smul.addr %s227, 96
          %s229 = scalar_lea.vmem [#allocation3], %s228
          %s230 = smul.u32 8, %s35
          %s232 = ssub.s32 1536, 1536
          %233 = vsyncadd %s226, %s232
          %s234 = smul.addr %s230, 6
          %s235 = smul.addr %s34, 48
          %s236 = sadd.s32 %s234, %s235
          %s237 = smul.addr %s236, 32
          %s238 = scalar_lea.hbm %s0, %s237
          %s239 = sshll.u32 %s229, 4
          %s240 = int_to_ptr.vmem [resolvable:$true] %s239
          %245 = dma.hbm_to_vmem [thread:$0]  %s238, 1536, %s240, %s226, 64, 64, 4
        $region20: #{tpu_custom_call.1} parent=15 // pred_fallthru
          _
        // Predicated region
        $region21: #{tpu_custom_call.1} parent=15 // pred_check
          %p246 = pneg %p87
        $region22: #{tpu_custom_call.1} parent=15 // pred_check_branch
          %248 = sbr.rel (%p246) target = $region24
        $region23: #{tpu_custom_call.1} parent=15 // pred_region
          %s249 = sand.u32 %s27, 1
          %s250 = scalar_lea.sflag [#allocation7], %s249
          %s251 = sand.u32 %s77, 1
          %s252 = smul.addr %s251, 4
          %s253 = scalar_lea.vmem [#allocation6], %s252
          %s255 = ssub.s32 64, 64
          %256 = vsyncadd %s250, %s255
          %s257 = smul.addr %s34, 12
          %s258 = sadd.s32 10, %s257
          %s259 = smul.addr %s258, 32
          %s260 = scalar_lea.hbm %s1, %s259
          %s262 = sshll.u32 %s253, 4
          %s263 = int_to_ptr.vmem [resolvable:$true] %s262
          %265 = dma.hbm_to_vmem [thread:$0]  %s260, 64, %s263, %s250
        $region24: #{tpu_custom_call.1} parent=15 // pred_fallthru
          _
        // Predicated region
        $region25: #{tpu_custom_call.1} parent=15 // pred_check
          %p266 = pneg %p113
        $region26: #{tpu_custom_call.1} parent=15 // pred_check_branch
          %268 = sbr.rel (%p266) target = $region28
        $region27: #{tpu_custom_call.1} parent=15 // pred_region
          %s269 = sand.u32 %s27, 1
          %s270 = scalar_lea.sflag [#allocation7], %s269
          %s271 = sand.u32 %s103, 1
          %s272 = smul.addr %s271, 4
          %s273 = scalar_lea.vmem [#allocation8], %s272
          %s275 = ssub.s32 64, 64
          %276 = vsyncadd %s270, %s275
          %s277 = smul.addr %s34, 12
          %s278 = sadd.s32 4, %s277
          %s279 = smul.addr %s278, 32
          %s280 = scalar_lea.hbm %s2, %s279
          %s282 = sshll.u32 %s273, 4
          %s283 = int_to_ptr.vmem [resolvable:$true] %s282
          %285 = dma.hbm_to_vmem [thread:$0]  %s280, 64, %s283, %s270
        $region28: #{tpu_custom_call.1} parent=15 // pred_fallthru
          _
        // Predicated region
        $region29: #{tpu_custom_call.1} parent=15 // pred_check
          %p286 = pneg %p141
        $region30: #{tpu_custom_call.1} parent=15 // pred_check_branch
          %288 = sbr.rel (%p286) target = $region32
        $region31: #{tpu_custom_call.1} parent=15 // pred_region
          %s289 = sand.u32 %s131, 1
          %s290 = scalar_lea.sflag [#allocation10], %s289
          %s291 = sand.u32 %s131, 1
          %s292 = smul.addr %s291, 32
          %s293 = scalar_lea.vmem [#allocation9], %s292
          %s294 = smul.u32 8, %s35
          %s296 = ssub.s32 512, 512
          %297 = vsyncadd %s290, %s296
          %s298 = smul.addr %s294, 2
          %s299 = smul.addr %s34, 16
          %s300 = sadd.s32 %s298, %s299
          %s301 = smul.addr %s300, 32
          %s302 = scalar_lea.hbm %s3, %s301
          %s303 = sshll.u32 %s293, 4
          %s304 = int_to_ptr.vmem [resolvable:$true] %s303
          %309 = dma.hbm_to_vmem [thread:$0]  %s302, 512, %s304, %s290, 64, 64, 4
        $region32: #{tpu_custom_call.1} parent=15 // pred_fallthru
          _
      $region16: #{tpu_custom_call.1} parent=5 // pred_fallthru
        _
      %p310 = scmp.le.s32.totalorder 1, %s27
      %p311 = scmp.lt.s32.totalorder %s27, 3
      %p312 = pnand %p310, %p311
      %p313 = pneg %p312
      // Predicated region
      $region33: #{tpu_custom_call.1} parent=5 // pred_check
        _
      $region34: #{tpu_custom_call.1} parent=5 // pred_check_branch
        %315 = sbr.rel (%p312) target = $region36
      $region35: #{tpu_custom_call.1} parent=5 // pred_region
        %s316 = ssub.s32 %s27, 1
        %s317 = sand.u32 %s54, 1
        %s318 = scalar_lea.sflag [#allocation4], %s317
        %s319 = sand.u32 %s54, 1
        %s320 = smul.addr %s319, 96
        %s321 = scalar_lea.vmem [#allocation3], %s320
        // Predicated region
        $region37: #{tpu_custom_call.1} parent=35 // pred_check
          %p322 = pneg %p67
        $region38: #{tpu_custom_call.1} parent=35 // pred_check_branch
          %324 = sbr.rel (%p322) target = $region40
        $region39: #{tpu_custom_call.1} parent=35 // pred_region
          %325 = dma.done %s318, 1536
        $region40: #{tpu_custom_call.1} parent=35 // pred_fallthru
          _
        %s326 = sand.u32 %s32, 1
        %s327 = scalar_lea.sflag [#allocation7], %s326
        %s328 = sand.u32 %s80, 1
        %s329 = smul.addr %s328, 4
        %s330 = scalar_lea.vmem [#allocation6], %s329
        // Predicated region
        $region41: #{tpu_custom_call.1} parent=35 // pred_check
          %p331 = pneg %p93
        $region42: #{tpu_custom_call.1} parent=35 // pred_check_branch
          %333 = sbr.rel (%p331) target = $region44
        $region43: #{tpu_custom_call.1} parent=35 // pred_region
          %334 = dma.done %s327, 64
        $region44: #{tpu_custom_call.1} parent=35 // pred_fallthru
          _
        %s335 = sand.u32 %s32, 1
        %s336 = scalar_lea.sflag [#allocation7], %s335
        %s337 = sand.u32 %s106, 1
        %s338 = smul.addr %s337, 4
        %s339 = scalar_lea.vmem [#allocation8], %s338
        // Predicated region
        $region45: #{tpu_custom_call.1} parent=35 // pred_check
          %p340 = pneg %p119
        $region46: #{tpu_custom_call.1} parent=35 // pred_check_branch
          %342 = sbr.rel (%p340) target = $region48
        $region47: #{tpu_custom_call.1} parent=35 // pred_region
          %343 = dma.done %s336, 64
        $region48: #{tpu_custom_call.1} parent=35 // pred_fallthru
          _
        %s344 = sand.u32 %s134, 1
        %s345 = scalar_lea.sflag [#allocation10], %s344
        %s346 = sand.u32 %s134, 1
        %s347 = smul.addr %s346, 32
        %s348 = scalar_lea.vmem [#allocation9], %s347
        // Predicated region
        $region49: #{tpu_custom_call.1} parent=35 // pred_check
          %p349 = pneg %p147
        $region50: #{tpu_custom_call.1} parent=35 // pred_check_branch
          %351 = sbr.rel (%p349) target = $region52
        $region51: #{tpu_custom_call.1} parent=35 // pred_region
          %352 = dma.done %s345, 512
        $region52: #{tpu_custom_call.1} parent=35 // pred_fallthru
          _
        %s353 = sand.u32 %s54, 1
        %s354 = scalar_lea.sflag [#allocation4], %s353
        %s355 = sand.u32 %s54, 1
        %s356 = smul.addr %s355, 96
        %s357 = scalar_lea.vmem [#allocation3], %s356
        %p358 = pneg %p67
        %p359 = pneg %p64
        %s360 = sand.u32 %s32, 1
        %s361 = scalar_lea.sflag [#allocation7], %s360
        %s362 = sand.u32 %s80, 1
        %s363 = smul.addr %s362, 4
        %s364 = scalar_lea.vmem [#allocation6], %s363
        %p365 = pneg %p93
        %p366 = pneg %p90
        %s367 = sand.u32 %s32, 1
        %s368 = scalar_lea.sflag [#allocation7], %s367
        %s369 = sand.u32 %s106, 1
        %s370 = smul.addr %s369, 4
        %s371 = scalar_lea.vmem [#allocation8], %s370
        %p372 = pneg %p119
        %p373 = pneg %p116
        %s374 = sand.u32 %s134, 1
        %s375 = scalar_lea.sflag [#allocation10], %s374
        %s376 = sand.u32 %s134, 1
        %s377 = smul.addr %s376, 32
        %s378 = scalar_lea.vmem [#allocation9], %s377
        %p379 = pneg %p147
        %p380 = pneg %p144
        %p381 = pneg %p175
        %p382 = pneg %p172
        %s383 = sand.u32 %s162, 1
        %s384 = scalar_lea.sflag [#allocation5], %s383
        %s385 = sand.u32 %s162, 1
        %s386 = smul.addr %s385, 32
        %s387 = scalar_lea.vmem [#allocation11], %s386
        %p388 = pneg %p203
        %p389 = pneg %p200
        %s390 = sand.u32 %s190, 1
        %s391 = scalar_lea.sflag [#allocation13], %s390
        %s392 = sand.u32 %s190, 1
        %s393 = smul.addr %s392, 32
        %s394 = scalar_lea.vmem [#allocation12], %s393
        %s395 = smul.u32 8, %s37
        %s396 = smul.u32 8, %s37
        %s397 = smul.u32 8, %s37
        %s398 = smul.u32 8, %s37
        %v399 = vld [vmem:[%s330] sm:$0xf]
        %v400 = vmul.f32 %v399, 1e-07
        %v401 = vld [vmem:[%s339] sm:$0xf]
        %v402 = vmul.f32 %v401, 100000.0
        %v403 = vlaneseq
        %v404 = vand.u32 %v403, 127
        %v405 = vadd.s32 %v404, 128
        %vm406 = vcmp.ge.s32.totalorder %v404, 16
        %vm407 = vcmp.ge.s32.totalorder %v405, 16
        %vm408 = vcmp.lt.s32.totalorder %v404, 224
        %vm409 = vcmp.lt.s32.totalorder %v405, 224
        %vm410 = vmand %vm406, %vm408
        %vm411 = vmand %vm407, %vm409
        %vm412 = vcmp.lt.s32.totalorder %v404, 0
        %v413 = vsub.s32 0, %v404
        %v414 = vsel %vm412, %v413, %v404
        %v415 = vshrl.u32 %v414, 4
        %v416 = vand.u32 %v414, 15
        %v417 = vsub.s32 0, %v416
        %v418 = vsel %vm412, %v417, %v416
        %vm419 = vcmp.lt.s32.totalorder %v405, 0
        %v420 = vsub.s32 0, %v405
        %v421 = vsel %vm419, %v420, %v405
        %v422 = vshrl.u32 %v421, 4
        %v423 = vand.u32 %v421, 15
        %v424 = vsub.s32 0, %v423
        %v425 = vsel %vm419, %v424, %v423
        %vm426 = vcmp.ne.s32.totalorder %v418, 0
        %vm427 = vcmp.ne.s32.totalorder %v425, 0
        %vm428 = vcmp.lt.s32.totalorder %v418, 0
        %vm429 = vcmp.lt.s32.totalorder %v425, 0
        %vm430 = vmand %vm428, %vm426
        %vm431 = vmand %vm429, %vm427
        %v432 = vadd.s32 %v418, 16
        %v433 = vadd.s32 %v425, 16
        %v434 = vsel %vm430, %v432, %v418
        %v435 = vsel %vm431, %v433, %v425
        %vm436 = vcmp.le.s32.totalorder %v434, 14
        %vm437 = vcmp.le.s32.totalorder %v435, 14
        %vm438 = vmand %vm410, %vm436
        %vm439 = vmand %vm411, %vm437
        %v440 = vld [vmem:[%s321] sm:$0xf]
        %s441 = scalar_lea.vmem %s321, 4 [#allocation3]
        %v442 = vld [vmem:[%s441] sm:$0xf]
        %s443 = scalar_lea.vmem %s321, 8 [#allocation3]
        %v444 = vld [vmem:[%s443] sm:$0xf]
        %v445 = vld [vmem:[%s348] sm:$0xf]
        %v446 = vmul.f32 %v400, %v440
        %v447 = vsub.f32 %v440, %v440
        %v448 = vmul.f32 %v402, %v447
        %v449 = vadd.f32 %v446, %v448
        %v452 = vunpack.c.l.s4 1983009808
        %v453 = vunpack.c.0.s8 %v452
        %v454 = vlaneseq
        %v455 = vshrl.u32 %v454, 7
        %v456 = vsub.s32 %v453, %v455
        %v457 = vrot.slane %v449, %v456
        %v458 = vcombine.high %v457, %v457
        %v461 = vsel %vm438, %v457, 0.0
        %v462 = vsel %vm439, %v458, 0.0
        %v465 = vcombine.low %v461, %v462
        %v467 = vunpack.c.l.s4 1983009808
        %v468 = vunpack.c.0.s8 %v467
        %v469 = vlaneseq
        %v470 = vshrl.u32 %v469, 7
        %v471 = vsub.s32 %v468, %v470
        %v472 = vrot.slane %v465, %v471
        %474 = vst [vmem:[%s387] sm:$0xf] %v472
        %v477 = vunpack.c.l.s4 1983009808
        %v478 = vunpack.c.0.s8 %v477
        %v479 = vlaneseq
        %v480 = vshrl.u32 %v479, 7
        %v481 = vsub.s32 %v478, %v480
        %v482 = vrot.slane %v444, %v481
        %v483 = vcombine.high %v482, %v482
        %486 = vrot.lane.b32.xlu0 %v482, 112
        %v487 = vpop.permute.xlu0 %486
        %488 = vrot.lane.b32.xlu0 %v483, 112
        %v489 = vpop.permute.xlu0 %488
        %vm490 = vcmp.lt.s32.totalorder %v404, 112
        %v491 = vsel %vm490, %v487, %v489
        %v492 = vsel %vm490, %v489, %v487
        %v495 = vunpack.c.l.s4 1983009808
        %v496 = vunpack.c.0.s8 %v495
        %v497 = vlaneseq
        %v498 = vshrl.u32 %v497, 7
        %v499 = vsub.s32 %v496, %v498
        %v500 = vrot.slane %v442, %v499
        %v501 = vcombine.high %v500, %v500
        %504 = vrot.lane.b32.xlu0 %v500, 127
        %v505 = vpop.permute.xlu0 %504
        %506 = vrot.lane.b32.xlu0 %v501, 127
        %v507 = vpop.permute.xlu0 %506
        %vm508 = vcmp.lt.s32.totalorder %v404, 127
        %v509 = vsel %vm508, %v505, %v507
        %v510 = vsel %vm508, %v507, %v505
        %v511 = vsub.f32 %v491, %v482
        %v512 = vsub.f32 %v492, %v483
        %v513 = vmul.f32 %v511, 1e-06
        %v514 = vmul.f32 %v512, 1e-06
        %v515 = vsub.f32 %v509, %v500
        %v516 = vsub.f32 %v510, %v501
        %v517 = vmul.f32 %v515, 1e-06
        %v518 = vmul.f32 %v516, 1e-06
        %v519 = vsub.f32 %v513, %v517
        %v520 = vsub.f32 %v514, %v518
        %v521 = vmul.f32 %v445, 1e-06
        %v524 = vunpack.c.l.s4 1983009808
        %v525 = vunpack.c.0.s8 %v524
        %v526 = vlaneseq
        %v527 = vshrl.u32 %v526, 7
        %v528 = vsub.s32 %v525, %v527
        %v529 = vrot.slane %v521, %v528
        %v530 = vcombine.high %v529, %v529
        %v533 = vsub.f32 %v519, %v529
        %v534 = vsub.f32 %v520, %v530
        %v535 = vsel %vm438, %v533, 0.0
        %v536 = vsel %vm439, %v534, 0.0
        %v539 = vcombine.low %v535, %v536
        %v541 = vunpack.c.l.s4 1983009808
        %v542 = vunpack.c.0.s8 %v541
        %v543 = vlaneseq
        %v544 = vshrl.u32 %v543, 7
        %v545 = vsub.s32 %v542, %v544
        %v546 = vrot.slane %v539, %v545
        %548 = vst [vmem:[%s394] sm:$0xf] %v546
        %s549 = scalar_lea.vmem %s321, 12 [#allocation3]
        %v550 = vld [vmem:[%s549] sm:$0xf]
        %s551 = scalar_lea.vmem %s321, 16 [#allocation3]
        %v552 = vld [vmem:[%s551] sm:$0xf]
        %s553 = scalar_lea.vmem %s321, 20 [#allocation3]
        %v554 = vld [vmem:[%s553] sm:$0xf]
        %s555 = scalar_lea.vmem %s348, 4 [#allocation9]
        %v556 = vld [vmem:[%s555] sm:$0xf]
        %v557 = vld [vmem:[%s321] sm:$0xf]
        %v558 = vmul.f32 %v400, %v550
        %v559 = vsub.f32 %v550, %v557
        %v560 = vmul.f32 %v402, %v559
        %v561 = vadd.f32 %v558, %v560
        %v564 = vunpack.c.l.s4 1983009808
        %v565 = vunpack.c.0.s8 %v564
        %v566 = vlaneseq
        %v567 = vshrl.u32 %v566, 7
        %v568 = vsub.s32 %v565, %v567
        %v569 = vrot.slane %v561, %v568
        %v570 = vcombine.high %v569, %v569
        %v573 = vsel %vm438, %v569, 0.0
        %v574 = vsel %vm439, %v570, 0.0
        %v577 = vcombine.low %v573, %v574
        %v579 = vunpack.c.l.s4 1983009808
        %v580 = vunpack.c.0.s8 %v579
        %v581 = vlaneseq
        %v582 = vshrl.u32 %v581, 7
        %v583 = vsub.s32 %v580, %v582
        %v584 = vrot.slane %v577, %v583
        %s586 = scalar_lea.vmem %s387, 4 [#allocation11]
        %587 = vst [vmem:[%s586] sm:$0xf] %v584
        %v590 = vunpack.c.l.s4 1983009808
        %v591 = vunpack.c.0.s8 %v590
        %v592 = vlaneseq
        %v593 = vshrl.u32 %v592, 7
        %v594 = vsub.s32 %v591, %v593
        %v595 = vrot.slane %v554, %v594
        %v596 = vcombine.high %v595, %v595
        %599 = vrot.lane.b32.xlu0 %v595, 112
        %v600 = vpop.permute.xlu0 %599
        %601 = vrot.lane.b32.xlu0 %v596, 112
        %v602 = vpop.permute.xlu0 %601
        %v603 = vsel %vm490, %v600, %v602
        %v604 = vsel %vm490, %v602, %v600
        %v607 = vunpack.c.l.s4 1983009808
        %v608 = vunpack.c.0.s8 %v607
        %v609 = vlaneseq
        %v610 = vshrl.u32 %v609, 7
        %v611 = vsub.s32 %v608, %v610
        %v612 = vrot.slane %v552, %v611
        %v613 = vcombine.high %v612, %v612
        %616 = vrot.lane.b32.xlu0 %v612, 127
        %v617 = vpop.permute.xlu0 %616
        %618 = vrot.lane.b32.xlu0 %v613, 127
        %v619 = vpop.permute.xlu0 %618
        %v620 = vsel %vm508, %v617, %v619
        %v621 = vsel %vm508, %v619, %v617
        %v622 = vsub.f32 %v603, %v595
        %v623 = vsub.f32 %v604, %v596
        %v624 = vmul.f32 %v622, 1e-06
        %v625 = vmul.f32 %v623, 1e-06
        %v626 = vsub.f32 %v620, %v612
        %v627 = vsub.f32 %v621, %v613
        %v628 = vmul.f32 %v626, 1e-06
        %v629 = vmul.f32 %v627, 1e-06
        %v630 = vsub.f32 %v624, %v628
        %v631 = vsub.f32 %v625, %v629
        %v632 = vmul.f32 %v556, 1e-06
        %v635 = vunpack.c.l.s4 1983009808
        %v636 = vunpack.c.0.s8 %v635
        %v637 = vlaneseq
        %v638 = vshrl.u32 %v637, 7
        %v639 = vsub.s32 %v636, %v638
        %v640 = vrot.slane %v632, %v639
        %v641 = vcombine.high %v640, %v640
        %v644 = vsub.f32 %v630, %v640
        %v645 = vsub.f32 %v631, %v641
        %v646 = vsel %vm438, %v644, 0.0
        %v647 = vsel %vm439, %v645, 0.0
        %v650 = vcombine.low %v646, %v647
        %v652 = vunpack.c.l.s4 1983009808
        %v653 = vunpack.c.0.s8 %v652
        %v654 = vlaneseq
        %v655 = vshrl.u32 %v654, 7
        %v656 = vsub.s32 %v653, %v655
        %v657 = vrot.slane %v650, %v656
        %s659 = scalar_lea.vmem %s394, 4 [#allocation12]
        %660 = vst [vmem:[%s659] sm:$0xf] %v657
        %s661 = scalar_lea.vmem %s321, 24 [#allocation3]
        %v662 = vld [vmem:[%s661] sm:$0xf]
        %s663 = scalar_lea.vmem %s321, 28 [#allocation3]
        %v664 = vld [vmem:[%s663] sm:$0xf]
        %s665 = scalar_lea.vmem %s321, 32 [#allocation3]
        %v666 = vld [vmem:[%s665] sm:$0xf]
        %s667 = scalar_lea.vmem %s348, 8 [#allocation9]
        %v668 = vld [vmem:[%s667] sm:$0xf]
        %v669 = vld [vmem:[%s549] sm:$0xf]
        %v670 = vmul.f32 %v400, %v662
        %v671 = vsub.f32 %v662, %v669
        %v672 = vmul.f32 %v402, %v671
        %v673 = vadd.f32 %v670, %v672
        %v676 = vunpack.c.l.s4 1983009808
        %v677 = vunpack.c.0.s8 %v676
        %v678 = vlaneseq
        %v679 = vshrl.u32 %v678, 7
        %v680 = vsub.s32 %v677, %v679
        %v681 = vrot.slane %v673, %v680
        %v682 = vcombine.high %v681, %v681
        %v685 = vsel %vm438, %v681, 0.0
        %v686 = vsel %vm439, %v682, 0.0
        %v689 = vcombine.low %v685, %v686
        %v691 = vunpack.c.l.s4 1983009808
        %v692 = vunpack.c.0.s8 %v691
        %v693 = vlaneseq
        %v694 = vshrl.u32 %v693, 7
        %v695 = vsub.s32 %v692, %v694
        %v696 = vrot.slane %v689, %v695
        %s698 = scalar_lea.vmem %s387, 8 [#allocation11]
        %699 = vst [vmem:[%s698] sm:$0xf] %v696
        %v702 = vunpack.c.l.s4 1983009808
        %v703 = vunpack.c.0.s8 %v702
        %v704 = vlaneseq
        %v705 = vshrl.u32 %v704, 7
        %v706 = vsub.s32 %v703, %v705
        %v707 = vrot.slane %v666, %v706
        %v708 = vcombine.high %v707, %v707
        %711 = vrot.lane.b32.xlu0 %v707, 112
        %v712 = vpop.permute.xlu0 %711
        %713 = vrot.lane.b32.xlu0 %v708, 112
        %v714 = vpop.permute.xlu0 %713
        %v715 = vsel %vm490, %v712, %v714
        %v716 = vsel %vm490, %v714, %v712
        %v719 = vunpack.c.l.s4 1983009808
        %v720 = vunpack.c.0.s8 %v719
        %v721 = vlaneseq
        %v722 = vshrl.u32 %v721, 7
        %v723 = vsub.s32 %v720, %v722
        %v724 = vrot.slane %v664, %v723
        %v725 = vcombine.high %v724, %v724
        %728 = vrot.lane.b32.xlu0 %v724, 127
        %v729 = vpop.permute.xlu0 %728
        %730 = vrot.lane.b32.xlu0 %v725, 127
        %v731 = vpop.permute.xlu0 %730
        %v732 = vsel %vm508, %v729, %v731
        %v733 = vsel %vm508, %v731, %v729
        %v734 = vsub.f32 %v715, %v707
        %v735 = vsub.f32 %v716, %v708
        %v736 = vmul.f32 %v734, 1e-06
        %v737 = vmul.f32 %v735, 1e-06
        %v738 = vsub.f32 %v732, %v724
        %v739 = vsub.f32 %v733, %v725
        %v740 = vmul.f32 %v738, 1e-06
        %v741 = vmul.f32 %v739, 1e-06
        %v742 = vsub.f32 %v736, %v740
        %v743 = vsub.f32 %v737, %v741
        %v744 = vmul.f32 %v668, 1e-06
        %v747 = vunpack.c.l.s4 1983009808
        %v748 = vunpack.c.0.s8 %v747
        %v749 = vlaneseq
        %v750 = vshrl.u32 %v749, 7
        %v751 = vsub.s32 %v748, %v750
        %v752 = vrot.slane %v744, %v751
        %v753 = vcombine.high %v752, %v752
        %v756 = vsub.f32 %v742, %v752
        %v757 = vsub.f32 %v743, %v753
        %v758 = vsel %vm438, %v756, 0.0
        %v759 = vsel %vm439, %v757, 0.0
        %v762 = vcombine.low %v758, %v759
        %v764 = vunpack.c.l.s4 1983009808
        %v765 = vunpack.c.0.s8 %v764
        %v766 = vlaneseq
        %v767 = vshrl.u32 %v766, 7
        %v768 = vsub.s32 %v765, %v767
        %v769 = vrot.slane %v762, %v768
        %s771 = scalar_lea.vmem %s394, 8 [#allocation12]
        %772 = vst [vmem:[%s771] sm:$0xf] %v769
        %s773 = scalar_lea.vmem %s321, 36 [#allocation3]
        %v774 = vld [vmem:[%s773] sm:$0xf]
        %s775 = scalar_lea.vmem %s321, 40 [#allocation3]
        %v776 = vld [vmem:[%s775] sm:$0xf]
        %s777 = scalar_lea.vmem %s321, 44 [#allocation3]
        %v778 = vld [vmem:[%s777] sm:$0xf]
        %s779 = scalar_lea.vmem %s348, 12 [#allocation9]
        %v780 = vld [vmem:[%s779] sm:$0xf]
        %v781 = vld [vmem:[%s661] sm:$0xf]
        %v782 = vmul.f32 %v400, %v774
        %v783 = vsub.f32 %v774, %v781
        %v784 = vmul.f32 %v402, %v783
        %v785 = vadd.f32 %v782, %v784
        %v788 = vunpack.c.l.s4 1983009808
        %v789 = vunpack.c.0.s8 %v788
        %v790 = vlaneseq
        %v791 = vshrl.u32 %v790, 7
        %v792 = vsub.s32 %v789, %v791
        %v793 = vrot.slane %v785, %v792
        %v794 = vcombine.high %v793, %v793
        %v797 = vsel %vm438, %v793, 0.0
        %v798 = vsel %vm439, %v794, 0.0
        %v801 = vcombine.low %v797, %v798
        %v803 = vunpack.c.l.s4 1983009808
        %v804 = vunpack.c.0.s8 %v803
        %v805 = vlaneseq
        %v806 = vshrl.u32 %v805, 7
        %v807 = vsub.s32 %v804, %v806
        %v808 = vrot.slane %v801, %v807
        %s810 = scalar_lea.vmem %s387, 12 [#allocation11]
        %811 = vst [vmem:[%s810] sm:$0xf] %v808
        %v814 = vunpack.c.l.s4 1983009808
        %v815 = vunpack.c.0.s8 %v814
        %v816 = vlaneseq
        %v817 = vshrl.u32 %v816, 7
        %v818 = vsub.s32 %v815, %v817
        %v819 = vrot.slane %v778, %v818
        %v820 = vcombine.high %v819, %v819
        %823 = vrot.lane.b32.xlu0 %v819, 112
        %v824 = vpop.permute.xlu0 %823
        %825 = vrot.lane.b32.xlu0 %v820, 112
        %v826 = vpop.permute.xlu0 %825
        %v827 = vsel %vm490, %v824, %v826
        %v828 = vsel %vm490, %v826, %v824
        %v831 = vunpack.c.l.s4 1983009808
        %v832 = vunpack.c.0.s8 %v831
        %v833 = vlaneseq
        %v834 = vshrl.u32 %v833, 7
        %v835 = vsub.s32 %v832, %v834
        %v836 = vrot.slane %v776, %v835
        %v837 = vcombine.high %v836, %v836
        %840 = vrot.lane.b32.xlu0 %v836, 127
        %v841 = vpop.permute.xlu0 %840
        %842 = vrot.lane.b32.xlu0 %v837, 127
        %v843 = vpop.permute.xlu0 %842
        %v844 = vsel %vm508, %v841, %v843
        %v845 = vsel %vm508, %v843, %v841
        %v846 = vsub.f32 %v827, %v819
        %v847 = vsub.f32 %v828, %v820
        %v848 = vmul.f32 %v846, 1e-06
        %v849 = vmul.f32 %v847, 1e-06
        %v850 = vsub.f32 %v844, %v836
        %v851 = vsub.f32 %v845, %v837
        %v852 = vmul.f32 %v850, 1e-06
        %v853 = vmul.f32 %v851, 1e-06
        %v854 = vsub.f32 %v848, %v852
        %v855 = vsub.f32 %v849, %v853
        %v856 = vmul.f32 %v780, 1e-06
        %v859 = vunpack.c.l.s4 1983009808
        %v860 = vunpack.c.0.s8 %v859
        %v861 = vlaneseq
        %v862 = vshrl.u32 %v861, 7
        %v863 = vsub.s32 %v860, %v862
        %v864 = vrot.slane %v856, %v863
        %v865 = vcombine.high %v864, %v864
        %v868 = vsub.f32 %v854, %v864
        %v869 = vsub.f32 %v855, %v865
        %v870 = vsel %vm438, %v868, 0.0
        %v871 = vsel %vm439, %v869, 0.0
        %v874 = vcombine.low %v870, %v871
        %v876 = vunpack.c.l.s4 1983009808
        %v877 = vunpack.c.0.s8 %v876
        %v878 = vlaneseq
        %v879 = vshrl.u32 %v878, 7
        %v880 = vsub.s32 %v877, %v879
        %v881 = vrot.slane %v874, %v880
        %s883 = scalar_lea.vmem %s394, 12 [#allocation12]
        %884 = vst [vmem:[%s883] sm:$0xf] %v881
        %s885 = scalar_lea.vmem %s321, 48 [#allocation3]
        %v886 = vld [vmem:[%s885] sm:$0xf]
        %s887 = scalar_lea.vmem %s321, 52 [#allocation3]
        %v888 = vld [vmem:[%s887] sm:$0xf]
        %s889 = scalar_lea.vmem %s321, 56 [#allocation3]
        %v890 = vld [vmem:[%s889] sm:$0xf]
        %s891 = scalar_lea.vmem %s348, 16 [#allocation9]
        %v892 = vld [vmem:[%s891] sm:$0xf]
        %v893 = vld [vmem:[%s773] sm:$0xf]
        %v894 = vmul.f32 %v400, %v886
        %v895 = vsub.f32 %v886, %v893
        %v896 = vmul.f32 %v402, %v895
        %v897 = vadd.f32 %v894, %v896
        %v900 = vunpack.c.l.s4 1983009808
        %v901 = vunpack.c.0.s8 %v900
        %v902 = vlaneseq
        %v903 = vshrl.u32 %v902, 7
        %v904 = vsub.s32 %v901, %v903
        %v905 = vrot.slane %v897, %v904
        %v906 = vcombine.high %v905, %v905
        %v909 = vsel %vm438, %v905, 0.0
        %v910 = vsel %vm439, %v906, 0.0
        %v913 = vcombine.low %v909, %v910
        %v915 = vunpack.c.l.s4 1983009808
        %v916 = vunpack.c.0.s8 %v915
        %v917 = vlaneseq
        %v918 = vshrl.u32 %v917, 7
        %v919 = vsub.s32 %v916, %v918
        %v920 = vrot.slane %v913, %v919
        %s922 = scalar_lea.vmem %s387, 16 [#allocation11]
        %923 = vst [vmem:[%s922] sm:$0xf] %v920
        %v926 = vunpack.c.l.s4 1983009808
        %v927 = vunpack.c.0.s8 %v926
        %v928 = vlaneseq
        %v929 = vshrl.u32 %v928, 7
        %v930 = vsub.s32 %v927, %v929
        %v931 = vrot.slane %v890, %v930
        %v932 = vcombine.high %v931, %v931
        %935 = vrot.lane.b32.xlu0 %v931, 112
        %v936 = vpop.permute.xlu0 %935
        %937 = vrot.lane.b32.xlu0 %v932, 112
        %v938 = vpop.permute.xlu0 %937
        %v939 = vsel %vm490, %v936, %v938
        %v940 = vsel %vm490, %v938, %v936
        %v943 = vunpack.c.l.s4 1983009808
        %v944 = vunpack.c.0.s8 %v943
        %v945 = vlaneseq
        %v946 = vshrl.u32 %v945, 7
        %v947 = vsub.s32 %v944, %v946
        %v948 = vrot.slane %v888, %v947
        %v949 = vcombine.high %v948, %v948
        %952 = vrot.lane.b32.xlu0 %v948, 127
        %v953 = vpop.permute.xlu0 %952
        %954 = vrot.lane.b32.xlu0 %v949, 127
        %v955 = vpop.permute.xlu0 %954
        %v956 = vsel %vm508, %v953, %v955
        %v957 = vsel %vm508, %v955, %v953
        %v958 = vsub.f32 %v939, %v931
        %v959 = vsub.f32 %v940, %v932
        %v960 = vmul.f32 %v958, 1e-06
        %v961 = vmul.f32 %v959, 1e-06
        %v962 = vsub.f32 %v956, %v948
        %v963 = vsub.f32 %v957, %v949
        %v964 = vmul.f32 %v962, 1e-06
        %v965 = vmul.f32 %v963, 1e-06
        %v966 = vsub.f32 %v960, %v964
        %v967 = vsub.f32 %v961, %v965
        %v968 = vmul.f32 %v892, 1e-06
        %v971 = vunpack.c.l.s4 1983009808
        %v972 = vunpack.c.0.s8 %v971
        %v973 = vlaneseq
        %v974 = vshrl.u32 %v973, 7
        %v975 = vsub.s32 %v972, %v974
        %v976 = vrot.slane %v968, %v975
        %v977 = vcombine.high %v976, %v976
        %v980 = vsub.f32 %v966, %v976
        %v981 = vsub.f32 %v967, %v977
        %v982 = vsel %vm438, %v980, 0.0
        %v983 = vsel %vm439, %v981, 0.0
        %v986 = vcombine.low %v982, %v983
        %v988 = vunpack.c.l.s4 1983009808
        %v989 = vunpack.c.0.s8 %v988
        %v990 = vlaneseq
        %v991 = vshrl.u32 %v990, 7
        %v992 = vsub.s32 %v989, %v991
        %v993 = vrot.slane %v986, %v992
        %s995 = scalar_lea.vmem %s394, 16 [#allocation12]
        %996 = vst [vmem:[%s995] sm:$0xf] %v993
        %s997 = scalar_lea.vmem %s321, 60 [#allocation3]
        %v998 = vld [vmem:[%s997] sm:$0xf]
        %s999 = scalar_lea.vmem %s321, 64 [#allocation3]
        %v1000 = vld [vmem:[%s999] sm:$0xf]
        %s1001 = scalar_lea.vmem %s321, 68 [#allocation3]
        %v1002 = vld [vmem:[%s1001] sm:$0xf]
        %s1003 = scalar_lea.vmem %s348, 20 [#allocation9]
        %v1004 = vld [vmem:[%s1003] sm:$0xf]
        %v1005 = vld [vmem:[%s885] sm:$0xf]
        %v1006 = vmul.f32 %v400, %v998
        %v1007 = vsub.f32 %v998, %v1005
        %v1008 = vmul.f32 %v402, %v1007
        %v1009 = vadd.f32 %v1006, %v1008
        %v1012 = vunpack.c.l.s4 1983009808
        %v1013 = vunpack.c.0.s8 %v1012
        %v1014 = vlaneseq
        %v1015 = vshrl.u32 %v1014, 7
        %v1016 = vsub.s32 %v1013, %v1015
        %v1017 = vrot.slane %v1009, %v1016
        %v1018 = vcombine.high %v1017, %v1017
        %v1021 = vsel %vm438, %v1017, 0.0
        %v1022 = vsel %vm439, %v1018, 0.0
        %v1025 = vcombine.low %v1021, %v1022
        %v1027 = vunpack.c.l.s4 1983009808
        %v1028 = vunpack.c.0.s8 %v1027
        %v1029 = vlaneseq
        %v1030 = vshrl.u32 %v1029, 7
        %v1031 = vsub.s32 %v1028, %v1030
        %v1032 = vrot.slane %v1025, %v1031
        %s1034 = scalar_lea.vmem %s387, 20 [#allocation11]
        %1035 = vst [vmem:[%s1034] sm:$0xf] %v1032
        %v1038 = vunpack.c.l.s4 1983009808
        %v1039 = vunpack.c.0.s8 %v1038
        %v1040 = vlaneseq
        %v1041 = vshrl.u32 %v1040, 7
        %v1042 = vsub.s32 %v1039, %v1041
        %v1043 = vrot.slane %v1002, %v1042
        %v1044 = vcombine.high %v1043, %v1043
        %1047 = vrot.lane.b32.xlu0 %v1043, 112
        %v1048 = vpop.permute.xlu0 %1047
        %1049 = vrot.lane.b32.xlu0 %v1044, 112
        %v1050 = vpop.permute.xlu0 %1049
        %v1051 = vsel %vm490, %v1048, %v1050
        %v1052 = vsel %vm490, %v1050, %v1048
        %v1055 = vunpack.c.l.s4 1983009808
        %v1056 = vunpack.c.0.s8 %v1055
        %v1057 = vlaneseq
        %v1058 = vshrl.u32 %v1057, 7
        %v1059 = vsub.s32 %v1056, %v1058
        %v1060 = vrot.slane %v1000, %v1059
        %v1061 = vcombine.high %v1060, %v1060
        %1064 = vrot.lane.b32.xlu0 %v1060, 127
        %v1065 = vpop.permute.xlu0 %1064
        %1066 = vrot.lane.b32.xlu0 %v1061, 127
        %v1067 = vpop.permute.xlu0 %1066
        %v1068 = vsel %vm508, %v1065, %v1067
        %v1069 = vsel %vm508, %v1067, %v1065
        %v1070 = vsub.f32 %v1051, %v1043
        %v1071 = vsub.f32 %v1052, %v1044
        %v1072 = vmul.f32 %v1070, 1e-06
        %v1073 = vmul.f32 %v1071, 1e-06
        %v1074 = vsub.f32 %v1068, %v1060
        %v1075 = vsub.f32 %v1069, %v1061
        %v1076 = vmul.f32 %v1074, 1e-06
        %v1077 = vmul.f32 %v1075, 1e-06
        %v1078 = vsub.f32 %v1072, %v1076
        %v1079 = vsub.f32 %v1073, %v1077
        %v1080 = vmul.f32 %v1004, 1e-06
        %v1083 = vunpack.c.l.s4 1983009808
        %v1084 = vunpack.c.0.s8 %v1083
        %v1085 = vlaneseq
        %v1086 = vshrl.u32 %v1085, 7
        %v1087 = vsub.s32 %v1084, %v1086
        %v1088 = vrot.slane %v1080, %v1087
        %v1089 = vcombine.high %v1088, %v1088
        %v1092 = vsub.f32 %v1078, %v1088
        %v1093 = vsub.f32 %v1079, %v1089
        %v1094 = vsel %vm438, %v1092, 0.0
        %v1095 = vsel %vm439, %v1093, 0.0
        %v1098 = vcombine.low %v1094, %v1095
        %v1100 = vunpack.c.l.s4 1983009808
        %v1101 = vunpack.c.0.s8 %v1100
        %v1102 = vlaneseq
        %v1103 = vshrl.u32 %v1102, 7
        %v1104 = vsub.s32 %v1101, %v1103
        %v1105 = vrot.slane %v1098, %v1104
        %s1107 = scalar_lea.vmem %s394, 20 [#allocation12]
        %1108 = vst [vmem:[%s1107] sm:$0xf] %v1105
        %s1109 = scalar_lea.vmem %s321, 72 [#allocation3]
        %v1110 = vld [vmem:[%s1109] sm:$0xf]
        %s1111 = scalar_lea.vmem %s321, 76 [#allocation3]
        %v1112 = vld [vmem:[%s1111] sm:$0xf]
        %s1113 = scalar_lea.vmem %s321, 80 [#allocation3]
        %v1114 = vld [vmem:[%s1113] sm:$0xf]
        %s1115 = scalar_lea.vmem %s348, 24 [#allocation9]
        %v1116 = vld [vmem:[%s1115] sm:$0xf]
        %v1117 = vld [vmem:[%s997] sm:$0xf]
        %v1118 = vmul.f32 %v400, %v1110
        %v1119 = vsub.f32 %v1110, %v1117
        %v1120 = vmul.f32 %v402, %v1119
        %v1121 = vadd.f32 %v1118, %v1120
        %v1124 = vunpack.c.l.s4 1983009808
        %v1125 = vunpack.c.0.s8 %v1124
        %v1126 = vlaneseq
        %v1127 = vshrl.u32 %v1126, 7
        %v1128 = vsub.s32 %v1125, %v1127
        %v1129 = vrot.slane %v1121, %v1128
        %v1130 = vcombine.high %v1129, %v1129
        %v1133 = vsel %vm438, %v1129, 0.0
        %v1134 = vsel %vm439, %v1130, 0.0
        %v1137 = vcombine.low %v1133, %v1134
        %v1139 = vunpack.c.l.s4 1983009808
        %v1140 = vunpack.c.0.s8 %v1139
        %v1141 = vlaneseq
        %v1142 = vshrl.u32 %v1141, 7
        %v1143 = vsub.s32 %v1140, %v1142
        %v1144 = vrot.slane %v1137, %v1143
        %s1146 = scalar_lea.vmem %s387, 24 [#allocation11]
        %1147 = vst [vmem:[%s1146] sm:$0xf] %v1144
        %v1150 = vunpack.c.l.s4 1983009808
        %v1151 = vunpack.c.0.s8 %v1150
        %v1152 = vlaneseq
        %v1153 = vshrl.u32 %v1152, 7
        %v1154 = vsub.s32 %v1151, %v1153
        %v1155 = vrot.slane %v1114, %v1154
        %v1156 = vcombine.high %v1155, %v1155
        %1159 = vrot.lane.b32.xlu0 %v1155, 112
        %v1160 = vpop.permute.xlu0 %1159
        %1161 = vrot.lane.b32.xlu0 %v1156, 112
        %v1162 = vpop.permute.xlu0 %1161
        %v1163 = vsel %vm490, %v1160, %v1162
        %v1164 = vsel %vm490, %v1162, %v1160
        %v1167 = vunpack.c.l.s4 1983009808
        %v1168 = vunpack.c.0.s8 %v1167
        %v1169 = vlaneseq
        %v1170 = vshrl.u32 %v1169, 7
        %v1171 = vsub.s32 %v1168, %v1170
        %v1172 = vrot.slane %v1112, %v1171
        %v1173 = vcombine.high %v1172, %v1172
        %1176 = vrot.lane.b32.xlu0 %v1172, 127
        %v1177 = vpop.permute.xlu0 %1176
        %1178 = vrot.lane.b32.xlu0 %v1173, 127
        %v1179 = vpop.permute.xlu0 %1178
        %v1180 = vsel %vm508, %v1177, %v1179
        %v1181 = vsel %vm508, %v1179, %v1177
        %v1182 = vsub.f32 %v1163, %v1155
        %v1183 = vsub.f32 %v1164, %v1156
        %v1184 = vmul.f32 %v1182, 1e-06
        %v1185 = vmul.f32 %v1183, 1e-06
        %v1186 = vsub.f32 %v1180, %v1172
        %v1187 = vsub.f32 %v1181, %v1173
        %v1188 = vmul.f32 %v1186, 1e-06
        %v1189 = vmul.f32 %v1187, 1e-06
        %v1190 = vsub.f32 %v1184, %v1188
        %v1191 = vsub.f32 %v1185, %v1189
        %v1192 = vmul.f32 %v1116, 1e-06
        %v1195 = vunpack.c.l.s4 1983009808
        %v1196 = vunpack.c.0.s8 %v1195
        %v1197 = vlaneseq
        %v1198 = vshrl.u32 %v1197, 7
        %v1199 = vsub.s32 %v1196, %v1198
        %v1200 = vrot.slane %v1192, %v1199
        %v1201 = vcombine.high %v1200, %v1200
        %v1204 = vsub.f32 %v1190, %v1200
        %v1205 = vsub.f32 %v1191, %v1201
        %v1206 = vsel %vm438, %v1204, 0.0
        %v1207 = vsel %vm439, %v1205, 0.0
        %v1210 = vcombine.low %v1206, %v1207
        %v1212 = vunpack.c.l.s4 1983009808
        %v1213 = vunpack.c.0.s8 %v1212
        %v1214 = vlaneseq
        %v1215 = vshrl.u32 %v1214, 7
        %v1216 = vsub.s32 %v1213, %v1215
        %v1217 = vrot.slane %v1210, %v1216
        %s1219 = scalar_lea.vmem %s394, 24 [#allocation12]
        %1220 = vst [vmem:[%s1219] sm:$0xf] %v1217
        %s1221 = scalar_lea.vmem %s321, 84 [#allocation3]
        %v1222 = vld [vmem:[%s1221] sm:$0xf]
        %s1223 = scalar_lea.vmem %s321, 88 [#allocation3]
        %v1224 = vld [vmem:[%s1223] sm:$0xf]
        %s1225 = scalar_lea.vmem %s321, 92 [#allocation3]
        %v1226 = vld [vmem:[%s1225] sm:$0xf]
        %s1227 = scalar_lea.vmem %s348, 28 [#allocation9]
        %v1228 = vld [vmem:[%s1227] sm:$0xf]
        %v1229 = vld [vmem:[%s1109] sm:$0xf]
        %v1230 = vmul.f32 %v400, %v1222
        %v1231 = vsub.f32 %v1222, %v1229
        %v1232 = vmul.f32 %v402, %v1231
        %v1233 = vadd.f32 %v1230, %v1232
        %v1236 = vunpack.c.l.s4 1983009808
        %v1237 = vunpack.c.0.s8 %v1236
        %v1238 = vlaneseq
        %v1239 = vshrl.u32 %v1238, 7
        %v1240 = vsub.s32 %v1237, %v1239
        %v1241 = vrot.slane %v1233, %v1240
        %v1242 = vcombine.high %v1241, %v1241
        %v1245 = vsel %vm438, %v1241, 0.0
        %v1246 = vsel %vm439, %v1242, 0.0
        %v1249 = vcombine.low %v1245, %v1246
        %v1251 = vunpack.c.l.s4 1983009808
        %v1252 = vunpack.c.0.s8 %v1251
        %v1253 = vlaneseq
        %v1254 = vshrl.u32 %v1253, 7
        %v1255 = vsub.s32 %v1252, %v1254
        %v1256 = vrot.slane %v1249, %v1255
        %s1258 = scalar_lea.vmem %s387, 28 [#allocation11]
        %1259 = vst [vmem:[%s1258] sm:$0xf] %v1256
        %v1262 = vunpack.c.l.s4 1983009808
        %v1263 = vunpack.c.0.s8 %v1262
        %v1264 = vlaneseq
        %v1265 = vshrl.u32 %v1264, 7
        %v1266 = vsub.s32 %v1263, %v1265
        %v1267 = vrot.slane %v1226, %v1266
        %v1268 = vcombine.high %v1267, %v1267
        %1271 = vrot.lane.b32.xlu0 %v1267, 112
        %v1272 = vpop.permute.xlu0 %1271
        %1273 = vrot.lane.b32.xlu0 %v1268, 112
        %v1274 = vpop.permute.xlu0 %1273
        %v1275 = vsel %vm490, %v1272, %v1274
        %v1276 = vsel %vm490, %v1274, %v1272
        %v1279 = vunpack.c.l.s4 1983009808
        %v1280 = vunpack.c.0.s8 %v1279
        %v1281 = vlaneseq
        %v1282 = vshrl.u32 %v1281, 7
        %v1283 = vsub.s32 %v1280, %v1282
        %v1284 = vrot.slane %v1224, %v1283
        %v1285 = vcombine.high %v1284, %v1284
        %1288 = vrot.lane.b32.xlu0 %v1284, 127
        %v1289 = vpop.permute.xlu0 %1288
        %1290 = vrot.lane.b32.xlu0 %v1285, 127
        %v1291 = vpop.permute.xlu0 %1290
        %v1292 = vsel %vm508, %v1289, %v1291
        %v1293 = vsel %vm508, %v1291, %v1289
        %v1294 = vsub.f32 %v1275, %v1267
        %v1295 = vsub.f32 %v1276, %v1268
        %v1296 = vmul.f32 %v1294, 1e-06
        %v1297 = vmul.f32 %v1295, 1e-06
        %v1298 = vsub.f32 %v1292, %v1284
        %v1299 = vsub.f32 %v1293, %v1285
        %v1300 = vmul.f32 %v1298, 1e-06
        %v1301 = vmul.f32 %v1299, 1e-06
        %v1302 = vsub.f32 %v1296, %v1300
        %v1303 = vsub.f32 %v1297, %v1301
        %v1304 = vmul.f32 %v1228, 1e-06
        %v1307 = vunpack.c.l.s4 1983009808
        %v1308 = vunpack.c.0.s8 %v1307
        %v1309 = vlaneseq
        %v1310 = vshrl.u32 %v1309, 7
        %v1311 = vsub.s32 %v1308, %v1310
        %v1312 = vrot.slane %v1304, %v1311
        %v1313 = vcombine.high %v1312, %v1312
        %v1316 = vsub.f32 %v1302, %v1312
        %v1317 = vsub.f32 %v1303, %v1313
        %v1318 = vsel %vm438, %v1316, 0.0
        %v1319 = vsel %vm439, %v1317, 0.0
        %v1322 = vcombine.low %v1318, %v1319
        %v1324 = vunpack.c.l.s4 1983009808
        %v1325 = vunpack.c.0.s8 %v1324
        %v1326 = vlaneseq
        %v1327 = vshrl.u32 %v1326, 7
        %v1328 = vsub.s32 %v1325, %v1327
        %v1329 = vrot.slane %v1322, %v1328
        %s1331 = scalar_lea.vmem %s394, 28 [#allocation12]
        %1332 = vst [vmem:[%s1331] sm:$0xf] %v1329
        %s1333 = sand.u32 %s162, 1
        %s1334 = scalar_lea.sflag [#allocation5], %s1333
        %s1335 = sand.u32 %s162, 1
        %s1336 = smul.addr %s1335, 32
        %s1337 = scalar_lea.vmem [#allocation11], %s1336
        %s1338 = sand.u32 %s190, 1
        %s1339 = scalar_lea.sflag [#allocation13], %s1338
        %s1340 = sand.u32 %s190, 1
        %s1341 = smul.addr %s1340, 32
        %s1342 = scalar_lea.vmem [#allocation12], %s1341
        // Predicated region
        $region53: #{tpu_custom_call.1} parent=35 // pred_check
          %p1343 = pneg %p172
        $region54: #{tpu_custom_call.1} parent=35 // pred_check_branch
          %1345 = sbr.rel (%p1343) target = $region56
        $region55: #{tpu_custom_call.1} parent=35 // pred_region
          %s1346 = smul.u32 8, %s37
          %s1348 = ssub.s32 512, 512
          %1349 = vsyncadd %s1334, %s1348
          %s1350 = smul.addr %s1346, 2
          %s1351 = smul.addr %s36, 16
          %s1352 = sadd.s32 %s1350, %s1351
          %s1353 = smul.addr %s1352, 32
          %s1354 = scalar_lea.hbm %s4, %s1353
          %s1355 = sshll.u32 %s1337, 4
          %s1356 = int_to_ptr.vmem [resolvable:$true] %s1355
          %1361 = dma.vmem_to_hbm [thread:$0]  %s1356, 512, %s1354, %s1334, 64, 64, 4
        $region56: #{tpu_custom_call.1} parent=35 // pred_fallthru
          _
        // Predicated region
        $region57: #{tpu_custom_call.1} parent=35 // pred_check
          %p1362 = pneg %p200
        $region58: #{tpu_custom_call.1} parent=35 // pred_check_branch
          %1364 = sbr.rel (%p1362) target = $region60
        $region59: #{tpu_custom_call.1} parent=35 // pred_region
          %s1365 = smul.u32 8, %s37
          %s1367 = ssub.s32 512, 512
          %1368 = vsyncadd %s1339, %s1367
          %s1369 = smul.addr %s1365, 2
          %s1370 = smul.addr %s36, 16
          %s1371 = sadd.s32 %s1369, %s1370
          %s1372 = smul.addr %s1371, 32
          %s1373 = scalar_lea.hbm %s5, %s1372
          %s1374 = sshll.u32 %s1342, 4
          %s1375 = int_to_ptr.vmem [resolvable:$true] %s1374
          %1380 = dma.vmem_to_hbm [thread:$0]  %s1375, 512, %s1373, %s1339, 64, 64, 4
        $region60: #{tpu_custom_call.1} parent=35 // pred_fallthru
          _
      $region36: #{tpu_custom_call.1} parent=5 // pred_fallthru
        _
      %p1381 = scmp.le.s32.totalorder 2, %s27
      // Predicated region
      $region61: #{tpu_custom_call.1} parent=5 // pred_check
        %p1382 = pneg %p1381
      $region62: #{tpu_custom_call.1} parent=5 // pred_check_branch
        %1384 = sbr.rel (%p1382) target = $region64
      $region63: #{tpu_custom_call.1} parent=5 // pred_region
        %s1385 = ssub.s32 %s27, 2
        // Predicated region
        $region65: #{tpu_custom_call.1} parent=63 // pred_check
          %p1386 = pneg %p178
        $region66: #{tpu_custom_call.1} parent=63 // pred_check_branch
          %1388 = sbr.rel (%p1386) target = $region68
        $region67: #{tpu_custom_call.1} parent=63 // pred_region
          %s1389 = sand.u32 %s163, 1
          %s1390 = scalar_lea.sflag [#allocation5], %s1389
          %s1391 = sand.u32 %s163, 1
          %s1392 = smul.addr %s1391, 32
          %s1393 = scalar_lea.vmem [#allocation11], %s1392
          %1394 = dma.done %s1390, 512
        $region68: #{tpu_custom_call.1} parent=63 // pred_fallthru
          _
        // Predicated region
        $region69: #{tpu_custom_call.1} parent=63 // pred_check
          %p1395 = pneg %p206
        $region70: #{tpu_custom_call.1} parent=63 // pred_check_branch
          %1397 = sbr.rel (%p1395) target = $region72
        $region71: #{tpu_custom_call.1} parent=63 // pred_region
          %s1398 = sand.u32 %s191, 1
          %s1399 = scalar_lea.sflag [#allocation13], %s1398
          %s1400 = sand.u32 %s191, 1
          %s1401 = smul.addr %s1400, 32
          %s1402 = scalar_lea.vmem [#allocation12], %s1401
          %1403 = dma.done %s1399, 512
        $region72: #{tpu_custom_call.1} parent=63 // pred_fallthru
          _
      $region64: #{tpu_custom_call.1} parent=5 // pred_fallthru
        _
    $region6: #{tpu_custom_call.1} parent=1 // loop_footer
      %s31 = sadd.s32 1, %s27
    $region7: #{tpu_custom_call.1} parent=1 // loop_footer_branch
      %26 = sbr.rel target = $region3
    $region8: #{tpu_custom_call.1} parent=1 // loop_exit
      _
    %1404 = vsyncpa [#allocation4], 1
    %s1405 = scalar_lea.sflag [#allocation4], 1
    %1406 = vsyncpa %s1405, 1
    %1407 = vsyncpa [#allocation7], 1
    %s1408 = scalar_lea.sflag [#allocation7], 1
    %1409 = vsyncpa %s1408, 1
    %1410 = vsyncpa [#allocation10], 1
    %s1411 = scalar_lea.sflag [#allocation10], 1
    %1412 = vsyncpa %s1411, 1
    %1413 = vsyncpa [#allocation5], 1
    %s1414 = scalar_lea.sflag [#allocation5], 1
    %1415 = vsyncpa %s1414, 1
    %1416 = vsyncpa [#allocation13], 1
    %s1417 = scalar_lea.sflag [#allocation13], 1
    %1418 = vsyncpa %s1417, 1

</llo_original>
